<compile_context>
chip_gen: v7x
topology: tpu7x:2x2x1
jax: 0.10.0
libtpu: 0.0.40
codegen_flags: <defaults>
</compile_context>

<pallas_src>
import jax
import jax.numpy as jnp
from jax import lax
from jax.experimental import pallas as pl
from jax.experimental.pallas import tpu as pltpu

KH, KW = 5, 5            # conv kernel (matches module default kernel=(5, 5))
PH, PW = KH // 2, KW // 2


def _highway_kernel(x_ref, t1_ref, wg1_ref, t2_ref, wg2_ref, b_ref,
                    out_ref, pad_ref):
    """One grid step = TB batch elements, both highway stages.

    x_ref   : VMEM (TB, H, W)          input tile
    t1/t2   : VMEM (KH, W, W)          banded-Toeplitz matrices of the 5x5 convs
    wg1/wg2 : VMEM (KH, W)             gate conv weights (full-width kernel)
    b_ref   : SMEM (4,)                [b_conv1, b_gate1, b_conv2, b_gate2]
    out_ref : VMEM (TB, H, W)
    pad_ref : VMEM (TB, H+2*PH, W)     H-direction zero-padded staging scratch
    """
    TB, H, W = x_ref.shape
    inv_h = 1.0 / float(H)

    # Re-zero only the four thin H-halo rows every grid step.  Cheap,
    # order-independent, and safe when the "parallel" grid axis is sharded
    # across TensorCores (unlike the previous program_id==0 one-shot init).
    halo = jnp.zeros((TB, PH, W), jnp.float32)
    pad_ref[:, :PH, :] = halo
    pad_ref[:, PH + H:, :] = halo

    def stage(inp, t_ref, wg_ref, b_conv, b_gate):
        # Stage the input into the interior of the H-padded scratch; the
        # W-direction zero padding is folded into the Toeplitz band instead.
        pad_ref[:, PH:PH + H, :] = inp

        # ---- 5x5 conv as banded-Toeplitz matmuls on the MXU --------------
        # h = sum_di  slab_di @ T_di,  slab_di = rows [di, di+H) of the
        # padded input, T_di the (W, W) 5-diagonal band built from kernel
        # row di (precomputed in the wrapper).  f32 accumulation.
        acc = None
        for di in range(KH):
            slab = pad_ref[:, di:di + H, :].reshape(TB * H, W)
            part = jnp.dot(slab, t_ref[di],
                           preferred_element_type=jnp.float32)
            acc = part if acc is None else acc + part
        h = acc.reshape(TB, H, W)

        # ---- gate conv (kernel (KH, W), padding (PH, 0)), reduce-first ----
        # mean_i gate(inp)[i] is linear in inp, so reduce over H first: one
        # column sum plus a few boundary-row corrections on (TB, 1, W), then
        # a tiny (KH, W) MAC and a single lane reduction (XLU has slack).
        wg = wg_ref[...]                                      # (KH, W)
        col_sum = jnp.sum(inp, axis=1, keepdims=True)         # (TB, 1, W)
        gdot = None
        for di in range(KH):
            c = col_sum
            for r in range(max(di - PH, 0)):                  # rows clipped at top
                c = c - inp[:, r:r + 1, :]
            for r in range(max(PH - di, 0)):                  # rows clipped at bottom
                c = c - inp[:, H - 1 - r:H - r, :]
            term = c * wg[di:di + 1, :]
            gdot = term if gdot is None else gdot + term
        gsum = jnp.sum(gdot, axis=-1, keepdims=True)          # (TB, 1, 1)
        t = jax.nn.sigmoid(gsum * inv_h + b_gate)             # one gate / batch

        # Folded highway mix: (1-t)*inp + t*(conv+b) = inp + t*(conv+b-inp),
        # then ReLU.
        return jnp.maximum(inp + t * (h + b_conv - inp), 0.0)

    y = stage(x_ref[...], t1_ref, wg1_ref, b_ref[0], b_ref[1])
    out_ref[...] = stage(y, t2_ref, wg2_ref, b_ref[2], b_ref[3])


def _toeplitz_band(w, width):
    """(KH, KW) conv kernel -> (KH, width, width) banded-Toeplitz matrices.

    T[di, jp, j] = w[di, jp - j + PW] when |jp - j| <= PW, else 0, so that
    (slab_di @ T_di)[:, j] = sum_dj w[di, dj] * xpad[:, j + dj - PW] with the
    W-direction zero padding folded into the band.
    """
    j = jnp.arange(width)
    diff = j[:, None] - j[None, :]                # jp - j
    band = jnp.abs(diff) <= PW
    idx = jnp.clip(diff + PW, 0, KW - 1)
    t = w[:, idx]                                 # (KH, width, width)
    return jnp.where(band[None, :, :], t, 0.0).astype(jnp.float32)


def _pick_block_batch(B, H, W):
    """Batch elements per grid step.

    Target ~2 MiB f32 input tiles (amortizes the ~0.35 us per-step overhead
    and keeps the BlockSpec pipeline busy) while keeping the whole working
    set (double-buffered in/out, padded scratch, in-kernel intermediates)
    well under the 32 MiB scoped-VMEM limit requested below (v7x has only
    64 MiB physical VMEM per TensorCore).  Also keep >= 2 grid steps when B
    allows, so the "parallel" axis can be split across v7x's two cores.
    """
    bytes_per_batch = 4 * H * W
    cap = max(1, (2 * 1024 * 1024) // bytes_per_batch)
    tb = min(B, cap)
    if B >= 2:
        tb = min(tb, (B + 1) // 2)
    return max(tb, 1)


def convolutional_highway_forward(x, params):
    """x: (B, H, W) float32 -> (B, H, W) float32 (matches PyTorch forward)."""
    w1, b1, wg1, bg1, w2, b2, wg2, bg2 = params
    x = x.astype(jnp.float32)
    B, H, W = x.shape
    assert H >= 2, "sequence length must be >= 2"

    # Toeplitz bands for the two 5x5 convs, built once on the XLA side.
    T1 = _toeplitz_band(w1.astype(jnp.float32), W)            # (KH, W, W)
    T2 = _toeplitz_band(w2.astype(jnp.float32), W)            # (KH, W, W)
    biases = jnp.stack([b1, bg1, b2, bg2]).astype(jnp.float32)  # (4,)

    TB = _pick_block_batch(B, H, W)
    n_steps = -(-B // TB)                       # cdiv: no divisibility demand
    Bp = n_steps * TB
    xp = jnp.pad(x, ((0, Bp - B), (0, 0), (0, 0))) if Bp != B else x

    out = pl.pallas_call(
        _highway_kernel,
        out_shape=jax.ShapeDtypeStruct((Bp, H, W), jnp.float32),
        grid=(n_steps,),
        in_specs=[
            pl.BlockSpec((TB, H, W), lambda b: (b, 0, 0)),            # x
            pl.BlockSpec(memory_space=pltpu.MemorySpace.VMEM),        # T1
            pl.BlockSpec(memory_space=pltpu.MemorySpace.VMEM),        # wg1
            pl.BlockSpec(memory_space=pltpu.MemorySpace.VMEM),        # T2
            pl.BlockSpec(memory_space=pltpu.MemorySpace.VMEM),        # wg2
            pl.BlockSpec(memory_space=pltpu.MemorySpace.SMEM),        # biases
        ],
        out_specs=pl.BlockSpec((TB, H, W), lambda b: (b, 0, 0)),
        scratch_shapes=[pltpu.VMEM((TB, H + 2 * PH, W), jnp.float32)],
        compiler_params=pltpu.CompilerParams(
            dimension_semantics=("parallel",),
            vmem_limit_bytes=32 * 1024 * 1024),
    )(xp, T1, wg1.astype(jnp.float32), T2, wg2.astype(jnp.float32), biases)

    return out[:B] if Bp != B else out


# ---------------- pure-JAX reference (mirrors the PyTorch module) -----------
def _conv2d_11(x4, w, bias, pad):
    out = lax.conv_general_dilated(
        x4, w[None, None, :, :], window_strides=(1, 1), padding=pad,
        dimension_numbers=("NCHW", "OIHW", "NCHW"),
        precision=lax.Precision.HIGHEST)
    return out + bias


def reference_forward(x, params):
    w1, b1, wg1, bg1, w2, b2, wg2, bg2 = params
    xe = x[:, None, :, :]                                       # (B,1,H,W)
    h = _conv2d_11(xe, w1, b1, ((PH, PH), (PW, PW)))
    g = _conv2d_11(xe, wg1, bg1, ((PH, PH), (0, 0)))            # (B,1,H,1)
    t = jax.nn.sigmoid(jnp.mean(g, axis=2))[..., None]          # (B,1,1,1)
    y = jnp.maximum((1 - t) * xe + t * h, 0.0)
    h2 = _conv2d_11(y, w2, b2, ((PH, PH), (PW, PW)))
    g2 = _conv2d_11(y, wg2, bg2, ((PH, PH), (0, 0)))
    t2 = jax.nn.sigmoid(jnp.mean(g2, axis=2))[..., None]
    out = jnp.maximum((1 - t2) * y + t2 * h2, 0.0)
    return out[:, 0]


if __name__ == "__main__":
    key = jax.random.PRNGKey(0)
    # Case 1: the basic small shape.  Case 2 exercises the cdiv grid with a
    # ragged (padded) batch and a multi-step grid.
    for (B, H, W) in [(2, 8, 32), (5, 16, 64)]:
        key, *ks = jax.random.split(key, 10)
        w1  = 0.1 * jax.random.normal(ks[0], (KH, KW), jnp.float32)
        b1  = 0.1 * jax.random.normal(ks[1], (), jnp.float32)
        wg1 = 0.1 * jax.random.normal(ks[2], (KH, W), jnp.float32)
        bg1 = 0.1 * jax.random.normal(ks[3], (), jnp.float32)
        w2  = 0.1 * jax.random.normal(ks[4], (KH, KW), jnp.float32)
        b2  = 0.1 * jax.random.normal(ks[5], (), jnp.float32)
        wg2 = 0.1 * jax.random.normal(ks[6], (KH, W), jnp.float32)
        bg2 = 0.1 * jax.random.normal(ks[7], (), jnp.float32)
        x   = jax.random.normal(ks[8], (B, H, W), jnp.float32)
        params = (w1, b1, wg1, bg1, w2, b2, wg2, bg2)

        out = jax.block_until_ready(convolutional_highway_forward(x, params))
        ref = reference_forward(x, params)
        assert out.shape == (B, H, W), out.shape
        if not jnp.allclose(out, ref, atol=2e-3, rtol=2e-3):
            err = float(jnp.max(jnp.abs(out - ref)))
            raise AssertionError(
                f"Pallas kernel mismatch at shape {(B, H, W)}: max abs err {err}")

    print("KERNEL_OK")
</pallas_src>

<mosaic_0001>
module attributes {stable_mosaic.version = 11 : i64} {
  func.func @_highway_kernel(%arg0: i32, %arg1: memref<1x8x32xf32, #tpu.memory_space<vmem>>, %arg2: memref<5x32x32xf32, #tpu.memory_space<vmem>>, %arg3: memref<5x32xf32, #tpu.memory_space<vmem>>, %arg4: memref<5x32x32xf32, #tpu.memory_space<vmem>>, %arg5: memref<5x32xf32, #tpu.memory_space<vmem>>, %arg6: memref<4xf32, #tpu.memory_space<smem>>, %arg7: memref<1x8x32xf32, #tpu.memory_space<vmem>>, %arg8: memref<1x12x32xf32, #tpu.memory_space<vmem>>) attributes {dimension_semantics = [#tpu.dimension_semantics<parallel>], iteration_bounds = array<i64: 2>, scalar_prefetch = 0 : i64, scratch_operands = 1 : i64, tpu.core_type = #tpu.core_type<tc>, window_params = [{transform_indices = @transform_0, window_bounds = array<i64: 1, 8, 32>}, {pipeline_mode = #tpu.pipeline_mode<synchronous>, transform_indices = @transform_1, window_bounds = array<i64: 5, 32, 32>}, {pipeline_mode = #tpu.pipeline_mode<synchronous>, transform_indices = @transform_2, window_bounds = array<i64: 5, 32>}, {pipeline_mode = #tpu.pipeline_mode<synchronous>, transform_indices = @transform_3, window_bounds = array<i64: 5, 32, 32>}, {pipeline_mode = #tpu.pipeline_mode<synchronous>, transform_indices = @transform_4, window_bounds = array<i64: 5, 32>}, {transform_indices = @transform_5, window_bounds = array<i64: 4>}, {transform_indices = @transform_6, window_bounds = array<i64: 1, 8, 32>}]} {
    %cst = arith.constant 0.000000e+00 : f32
    %0 = vector.broadcast %cst : f32 to vector<1x2x32xf32>
    %c0 = arith.constant 0 : index
    %c0_0 = arith.constant 0 : index
    %c0_1 = arith.constant 0 : index
    %1 = vector.load %arg8[%c0, %c0_0, %c0_1] : memref<1x12x32xf32, #tpu.memory_space<vmem>>, vector<1x2x32xf32>
    tpu.vector_store %arg8[%c0, %c0_0, %c0_1], %0 {strides = array<i32>} : memref<1x12x32xf32, #tpu.memory_space<vmem>>, vector<1x2x32xf32>,
    %c0_2 = arith.constant 0 : index
    %c10 = arith.constant 10 : index
    %c0_3 = arith.constant 0 : index
    %2 = vector.load %arg8[%c0_2, %c10, %c0_3] : memref<1x12x32xf32, #tpu.memory_space<vmem>>, vector<1x2x32xf32>
    tpu.vector_store %arg8[%c0_2, %c10, %c0_3], %0 {strides = array<i32>} : memref<1x12x32xf32, #tpu.memory_space<vmem>>, vector<1x2x32xf32>,
    %c0_4 = arith.constant 0 : index
    %c0_5 = arith.constant 0 : index
    %c0_6 = arith.constant 0 : index
    %3 = vector.load %arg1[%c0_4, %c0_5, %c0_6] : memref<1x8x32xf32, #tpu.memory_space<vmem>>, vector<1x8x32xf32>
    %c0_7 = arith.constant 0 : index
    %4 = memref.load %arg6[%c0_7] : memref<4xf32, #tpu.memory_space<smem>>
    %c1 = arith.constant 1 : index
    %5 = memref.load %arg6[%c1] : memref<4xf32, #tpu.memory_space<smem>>
    %c0_8 = arith.constant 0 : index
    %c2 = arith.constant 2 : index
    %c0_9 = arith.constant 0 : index
    %6 = vector.load %arg8[%c0_8, %c2, %c0_9] : memref<1x12x32xf32, #tpu.memory_space<vmem>>, vector<1x8x32xf32>
    tpu.vector_store %arg8[%c0_8, %c2, %c0_9], %3 {strides = array<i32>} : memref<1x12x32xf32, #tpu.memory_space<vmem>>, vector<1x8x32xf32>,
    %c0_10 = arith.constant 0 : index
    %c0_11 = arith.constant 0 : index
    %c0_12 = arith.constant 0 : index
    %7 = vector.load %arg8[%c0_10, %c0_11, %c0_12] : memref<1x12x32xf32, #tpu.memory_space<vmem>>, vector<1x8x32xf32>
    %8 = vector.shape_cast %7 : vector<1x8x32xf32> to vector<8x32xf32>
    %c0_13 = arith.constant 0 : index
    %c0_14 = arith.constant 0 : index
    %c0_15 = arith.constant 0 : index
    %9 = vector.load %arg2[%c0_13, %c0_14, %c0_15] : memref<5x32x32xf32, #tpu.memory_space<vmem>>, vector<1x32x32xf32>
    %10 = vector.shape_cast %9 : vector<1x32x32xf32> to vector<32x32xf32>
    %cst_16 = arith.constant dense<0.000000e+00> : vector<8x32xf32>
    %11 = tpu.matmul %8, %10, %cst_16 {dimension_numbers = #tpu.dot_dimension_numbers<[1], [0], [0], [1], [0, 0, 1, 1], [], []>} : vector<8x32xf32>, vector<32x32xf32>, vector<8x32xf32> -> vector<8x32xf32>
    %c0_17 = arith.constant 0 : index
    %c1_18 = arith.constant 1 : index
    %c0_19 = arith.constant 0 : index
    %12 = vector.load %arg8[%c0_17, %c1_18, %c0_19] : memref<1x12x32xf32, #tpu.memory_space<vmem>>, vector<1x8x32xf32>
    %13 = vector.shape_cast %12 : vector<1x8x32xf32> to vector<8x32xf32>
    %c1_20 = arith.constant 1 : index
    %c0_21 = arith.constant 0 : index
    %c0_22 = arith.constant 0 : index
    %14 = vector.load %arg2[%c1_20, %c0_21, %c0_22] : memref<5x32x32xf32, #tpu.memory_space<vmem>>, vector<1x32x32xf32>
    %15 = vector.shape_cast %14 : vector<1x32x32xf32> to vector<32x32xf32>
    %cst_23 = arith.constant dense<0.000000e+00> : vector<8x32xf32>
    %16 = tpu.matmul %13, %15, %cst_23 {dimension_numbers = #tpu.dot_dimension_numbers<[1], [0], [0], [1], [0, 0, 1, 1], [], []>} : vector<8x32xf32>, vector<32x32xf32>, vector<8x32xf32> -> vector<8x32xf32>
    %17 = arith.addf %11, %16 : vector<8x32xf32>
    %c0_24 = arith.constant 0 : index
    %c2_25 = arith.constant 2 : index
    %c0_26 = arith.constant 0 : index
    %18 = vector.load %arg8[%c0_24, %c2_25, %c0_26] : memref<1x12x32xf32, #tpu.memory_space<vmem>>, vector<1x8x32xf32>
    %19 = vector.shape_cast %18 : vector<1x8x32xf32> to vector<8x32xf32>
    %c2_27 = arith.constant 2 : index
    %c0_28 = arith.constant 0 : index
    %c0_29 = arith.constant 0 : index
    %20 = vector.load %arg2[%c2_27, %c0_28, %c0_29] : memref<5x32x32xf32, #tpu.memory_space<vmem>>, vector<1x32x32xf32>
    %21 = vector.shape_cast %20 : vector<1x32x32xf32> to vector<32x32xf32>
    %cst_30 = arith.constant dense<0.000000e+00> : vector<8x32xf32>
    %22 = tpu.matmul %19, %21, %cst_30 {dimension_numbers = #tpu.dot_dimension_numbers<[1], [0], [0], [1], [0, 0, 1, 1], [], []>} : vector<8x32xf32>, vector<32x32xf32>, vector<8x32xf32> -> vector<8x32xf32>
    %23 = arith.addf %17, %22 : vector<8x32xf32>
    %c0_31 = arith.constant 0 : index
    %c3 = arith.constant 3 : index
    %c0_32 = arith.constant 0 : index
    %24 = vector.load %arg8[%c0_31, %c3, %c0_32] : memref<1x12x32xf32, #tpu.memory_space<vmem>>, vector<1x8x32xf32>
    %25 = vector.shape_cast %24 : vector<1x8x32xf32> to vector<8x32xf32>
    %c3_33 = arith.constant 3 : index
    %c0_34 = arith.constant 0 : index
    %c0_35 = arith.constant 0 : index
    %26 = vector.load %arg2[%c3_33, %c0_34, %c0_35] : memref<5x32x32xf32, #tpu.memory_space<vmem>>, vector<1x32x32xf32>
    %27 = vector.shape_cast %26 : vector<1x32x32xf32> to vector<32x32xf32>
    %cst_36 = arith.constant dense<0.000000e+00> : vector<8x32xf32>
    %28 = tpu.matmul %25, %27, %cst_36 {dimension_numbers = #tpu.dot_dimension_numbers<[1], [0], [0], [1], [0, 0, 1, 1], [], []>} : vector<8x32xf32>, vector<32x32xf32>, vector<8x32xf32> -> vector<8x32xf32>
    %29 = arith.addf %23, %28 : vector<8x32xf32>
    %c0_37 = arith.constant 0 : index
    %c4 = arith.constant 4 : index
    %c0_38 = arith.constant 0 : index
    %30 = vector.load %arg8[%c0_37, %c4, %c0_38] : memref<1x12x32xf32, #tpu.memory_space<vmem>>, vector<1x8x32xf32>
    %31 = vector.shape_cast %30 : vector<1x8x32xf32> to vector<8x32xf32>
    %c4_39 = arith.constant 4 : index
    %c0_40 = arith.constant 0 : index
    %c0_41 = arith.constant 0 : index
    %32 = vector.load %arg2[%c4_39, %c0_40, %c0_41] : memref<5x32x32xf32, #tpu.memory_space<vmem>>, vector<1x32x32xf32>
    %33 = vector.shape_cast %32 : vector<1x32x32xf32> to vector<32x32xf32>
    %cst_42 = arith.constant dense<0.000000e+00> : vector<8x32xf32>
    %34 = tpu.matmul %31, %33, %cst_42 {dimension_numbers = #tpu.dot_dimension_numbers<[1], [0], [0], [1], [0, 0, 1, 1], [], []>} : vector<8x32xf32>, vector<32x32xf32>, vector<8x32xf32> -> vector<8x32xf32>
    %35 = arith.addf %29, %34 : vector<8x32xf32>
    %36 = vector.shape_cast %35 : vector<8x32xf32> to vector<1x8x32xf32>
    %c0_43 = arith.constant 0 : index
    %c0_44 = arith.constant 0 : index
    %37 = vector.load %arg3[%c0_43, %c0_44] : memref<5x32xf32, #tpu.memory_space<vmem>>, vector<5x32xf32>
    %cst_45 = arith.constant dense<0.000000e+00> : vector<1x32xf32>
    %38 = vector.multi_reduction <add>, %3, %cst_45 [1] : vector<1x8x32xf32> to vector<1x32xf32>
    %39 = vector.shape_cast %38 : vector<1x32xf32> to vector<1x1x32xf32>
    %40 = vector.extract_strided_slice %3 {offsets = [0, 7, 0], sizes = [1, 1, 32], strides = [1, 1, 1]} : vector<1x8x32xf32> to vector<1x1x32xf32>
    %41 = arith.subf %39, %40 : vector<1x1x32xf32>
    %42 = vector.extract_strided_slice %3 {offsets = [0, 6, 0], sizes = [1, 1, 32], strides = [1, 1, 1]} : vector<1x8x32xf32> to vector<1x1x32xf32>
    %43 = arith.subf %41, %42 : vector<1x1x32xf32>
    %44 = vector.extract_strided_slice %37 {offsets = [0, 0], sizes = [1, 32], strides = [1, 1]} : vector<5x32xf32> to vector<1x32xf32>
    %45 = vector.shape_cast %44 : vector<1x32xf32> to vector<1x1x32xf32>
    %46 = arith.mulf %43, %45 : vector<1x1x32xf32>
    %47 = vector.extract_strided_slice %3 {offsets = [0, 7, 0], sizes = [1, 1, 32], strides = [1, 1, 1]} : vector<1x8x32xf32> to vector<1x1x32xf32>
    %48 = arith.subf %39, %47 : vector<1x1x32xf32>
    %49 = vector.extract_strided_slice %37 {offsets = [1, 0], sizes = [1, 32], strides = [1, 1]} : vector<5x32xf32> to vector<1x32xf32>
    %50 = vector.shape_cast %49 : vector<1x32xf32> to vector<1x1x32xf32>
    %51 = arith.mulf %48, %50 : vector<1x1x32xf32>
    %52 = arith.addf %46, %51 : vector<1x1x32xf32>
    %53 = vector.extract_strided_slice %37 {offsets = [2, 0], sizes = [1, 32], strides = [1, 1]} : vector<5x32xf32> to vector<1x32xf32>
    %54 = vector.shape_cast %53 : vector<1x32xf32> to vector<1x1x32xf32>
    %55 = arith.mulf %39, %54 : vector<1x1x32xf32>
    %56 = arith.addf %52, %55 : vector<1x1x32xf32>
    %57 = vector.extract_strided_slice %3 {offsets = [0, 0, 0], sizes = [1, 1, 32], strides = [1, 1, 1]} : vector<1x8x32xf32> to vector<1x1x32xf32>
    %58 = arith.subf %39, %57 : vector<1x1x32xf32>
    %59 = vector.extract_strided_slice %37 {offsets = [3, 0], sizes = [1, 32], strides = [1, 1]} : vector<5x32xf32> to vector<1x32xf32>
    %60 = vector.shape_cast %59 : vector<1x32xf32> to vector<1x1x32xf32>
    %61 = arith.mulf %58, %60 : vector<1x1x32xf32>
    %62 = arith.addf %56, %61 : vector<1x1x32xf32>
    %63 = vector.extract_strided_slice %3 {offsets = [0, 0, 0], sizes = [1, 1, 32], strides = [1, 1, 1]} : vector<1x8x32xf32> to vector<1x1x32xf32>
    %64 = arith.subf %39, %63 : vector<1x1x32xf32>
    %65 = vector.extract_strided_slice %3 {offsets = [0, 1, 0], sizes = [1, 1, 32], strides = [1, 1, 1]} : vector<1x8x32xf32> to vector<1x1x32xf32>
    %66 = arith.subf %64, %65 : vector<1x1x32xf32>
    %67 = vector.extract_strided_slice %37 {offsets = [4, 0], sizes = [1, 32], strides = [1, 1]} : vector<5x32xf32> to vector<1x32xf32>
    %68 = vector.shape_cast %67 : vector<1x32xf32> to vector<1x1x32xf32>
    %69 = arith.mulf %66, %68 : vector<1x1x32xf32>
    %70 = arith.addf %62, %69 : vector<1x1x32xf32>
    %cst_46 = arith.constant dense<0.000000e+00> : vector<1x1xf32>
    %71 = vector.multi_reduction <add>, %70, %cst_46 [2] : vector<1x1x32xf32> to vector<1x1xf32>
    %72 = vector.shape_cast %71 : vector<1x1xf32> to vector<1x1x1xf32>
    %cst_47 = arith.constant 1.250000e-01 : f32
    %73 = vector.broadcast %cst_47 : f32 to vector<1x1x1xf32>
    %74 = arith.mulf %72, %73 : vector<1x1x1xf32>
    %75 = vector.broadcast %5 : f32 to vector<1x1x1xf32>
    %76 = arith.addf %74, %75 : vector<1x1x1xf32>
    %77 = arith.negf %76 : vector<1x1x1xf32>
    %78 = math.exp %77 : vector<1x1x1xf32>
    %cst_48 = arith.constant 1.000000e+00 : f32
    %79 = vector.broadcast %cst_48 : f32 to vector<1x1x1xf32>
    %80 = arith.addf %79, %78 : vector<1x1x1xf32>
    %81 = arith.divf %79, %80 : vector<1x1x1xf32>
    %82 = vector.broadcast %4 : f32 to vector<1x8x32xf32>
    %83 = arith.addf %36, %82 : vector<1x8x32xf32>
    %84 = arith.subf %83, %3 : vector<1x8x32xf32>
    %85 = vector.broadcast %81 : vector<1x1x1xf32> to vector<1x8x32xf32>
    %86 = arith.mulf %85, %84 : vector<1x8x32xf32>
    %87 = arith.addf %3, %86 : vector<1x8x32xf32>
    %cst_49 = arith.constant 0.000000e+00 : f32
    %88 = vector.broadcast %cst_49 : f32 to vector<1x8x32xf32>
    %89 = arith.maximumf %87, %88 : vector<1x8x32xf32>
    %c2_50 = arith.constant 2 : index
    %90 = memref.load %arg6[%c2_50] : memref<4xf32, #tpu.memory_space<smem>>
    %c3_51 = arith.constant 3 : index
    %91 = memref.load %arg6[%c3_51] : memref<4xf32, #tpu.memory_space<smem>>
    %c0_52 = arith.constant 0 : index
    %c2_53 = arith.constant 2 : index
    %c0_54 = arith.constant 0 : index
    %92 = vector.load %arg8[%c0_52, %c2_53, %c0_54] : memref<1x12x32xf32, #tpu.memory_space<vmem>>, vector<1x8x32xf32>
    tpu.vector_store %arg8[%c0_52, %c2_53, %c0_54], %89 {strides = array<i32>} : memref<1x12x32xf32, #tpu.memory_space<vmem>>, vector<1x8x32xf32>,
    %c0_55 = arith.constant 0 : index
    %c0_56 = arith.constant 0 : index
    %c0_57 = arith.constant 0 : index
    %93 = vector.load %arg8[%c0_55, %c0_56, %c0_57] : memref<1x12x32xf32, #tpu.memory_space<vmem>>, vector<1x8x32xf32>
    %94 = vector.shape_cast %93 : vector<1x8x32xf32> to vector<8x32xf32>
    %c0_58 = arith.constant 0 : index
    %c0_59 = arith.constant 0 : index
    %c0_60 = arith.constant 0 : index
    %95 = vector.load %arg4[%c0_58, %c0_59, %c0_60] : memref<5x32x32xf32, #tpu.memory_space<vmem>>, vector<1x32x32xf32>
    %96 = vector.shape_cast %95 : vector<1x32x32xf32> to vector<32x32xf32>
    %cst_61 = arith.constant dense<0.000000e+00> : vector<8x32xf32>
    %97 = tpu.matmul %94, %96, %cst_61 {dimension_numbers = #tpu.dot_dimension_numbers<[1], [0], [0], [1], [0, 0, 1, 1], [], []>} : vector<8x32xf32>, vector<32x32xf32>, vector<8x32xf32> -> vector<8x32xf32>
    %c0_62 = arith.constant 0 : index
    %c1_63 = arith.constant 1 : index
    %c0_64 = arith.constant 0 : index
    %98 = vector.load %arg8[%c0_62, %c1_63, %c0_64] : memref<1x12x32xf32, #tpu.memory_space<vmem>>, vector<1x8x32xf32>
    %99 = vector.shape_cast %98 : vector<1x8x32xf32> to vector<8x32xf32>
    %c1_65 = arith.constant 1 : index
    %c0_66 = arith.constant 0 : index
    %c0_67 = arith.constant 0 : index
    %100 = vector.load %arg4[%c1_65, %c0_66, %c0_67] : memref<5x32x32xf32, #tpu.memory_space<vmem>>, vector<1x32x32xf32>
    %101 = vector.shape_cast %100 : vector<1x32x32xf32> to vector<32x32xf32>
    %cst_68 = arith.constant dense<0.000000e+00> : vector<8x32xf32>
    %102 = tpu.matmul %99, %101, %cst_68 {dimension_numbers = #tpu.dot_dimension_numbers<[1], [0], [0], [1], [0, 0, 1, 1], [], []>} : vector<8x32xf32>, vector<32x32xf32>, vector<8x32xf32> -> vector<8x32xf32>
    %103 = arith.addf %97, %102 : vector<8x32xf32>
    %c0_69 = arith.constant 0 : index
    %c2_70 = arith.constant 2 : index
    %c0_71 = arith.constant 0 : index
    %104 = vector.load %arg8[%c0_69, %c2_70, %c0_71] : memref<1x12x32xf32, #tpu.memory_space<vmem>>, vector<1x8x32xf32>
    %105 = vector.shape_cast %104 : vector<1x8x32xf32> to vector<8x32xf32>
    %c2_72 = arith.constant 2 : index
    %c0_73 = arith.constant 0 : index
    %c0_74 = arith.constant 0 : index
    %106 = vector.load %arg4[%c2_72, %c0_73, %c0_74] : memref<5x32x32xf32, #tpu.memory_space<vmem>>, vector<1x32x32xf32>
    %107 = vector.shape_cast %106 : vector<1x32x32xf32> to vector<32x32xf32>
    %cst_75 = arith.constant dense<0.000000e+00> : vector<8x32xf32>
    %108 = tpu.matmul %105, %107, %cst_75 {dimension_numbers = #tpu.dot_dimension_numbers<[1], [0], [0], [1], [0, 0, 1, 1], [], []>} : vector<8x32xf32>, vector<32x32xf32>, vector<8x32xf32> -> vector<8x32xf32>
    %109 = arith.addf %103, %108 : vector<8x32xf32>
    %c0_76 = arith.constant 0 : index
    %c3_77 = arith.constant 3 : index
    %c0_78 = arith.constant 0 : index
    %110 = vector.load %arg8[%c0_76, %c3_77, %c0_78] : memref<1x12x32xf32, #tpu.memory_space<vmem>>, vector<1x8x32xf32>
    %111 = vector.shape_cast %110 : vector<1x8x32xf32> to vector<8x32xf32>
    %c3_79 = arith.constant 3 : index
    %c0_80 = arith.constant 0 : index
    %c0_81 = arith.constant 0 : index
    %112 = vector.load %arg4[%c3_79, %c0_80, %c0_81] : memref<5x32x32xf32, #tpu.memory_space<vmem>>, vector<1x32x32xf32>
    %113 = vector.shape_cast %112 : vector<1x32x32xf32> to vector<32x32xf32>
    %cst_82 = arith.constant dense<0.000000e+00> : vector<8x32xf32>
    %114 = tpu.matmul %111, %113, %cst_82 {dimension_numbers = #tpu.dot_dimension_numbers<[1], [0], [0], [1], [0, 0, 1, 1], [], []>} : vector<8x32xf32>, vector<32x32xf32>, vector<8x32xf32> -> vector<8x32xf32>
    %115 = arith.addf %109, %114 : vector<8x32xf32>
    %c0_83 = arith.constant 0 : index
    %c4_84 = arith.constant 4 : index
    %c0_85 = arith.constant 0 : index
    %116 = vector.load %arg8[%c0_83, %c4_84, %c0_85] : memref<1x12x32xf32, #tpu.memory_space<vmem>>, vector<1x8x32xf32>
    %117 = vector.shape_cast %116 : vector<1x8x32xf32> to vector<8x32xf32>
    %c4_86 = arith.constant 4 : index
    %c0_87 = arith.constant 0 : index
    %c0_88 = arith.constant 0 : index
    %118 = vector.load %arg4[%c4_86, %c0_87, %c0_88] : memref<5x32x32xf32, #tpu.memory_space<vmem>>, vector<1x32x32xf32>
    %119 = vector.shape_cast %118 : vector<1x32x32xf32> to vector<32x32xf32>
    %cst_89 = arith.constant dense<0.000000e+00> : vector<8x32xf32>
    %120 = tpu.matmul %117, %119, %cst_89 {dimension_numbers = #tpu.dot_dimension_numbers<[1], [0], [0], [1], [0, 0, 1, 1], [], []>} : vector<8x32xf32>, vector<32x32xf32>, vector<8x32xf32> -> vector<8x32xf32>
    %121 = arith.addf %115, %120 : vector<8x32xf32>
    %122 = vector.shape_cast %121 : vector<8x32xf32> to vector<1x8x32xf32>
    %c0_90 = arith.constant 0 : index
    %c0_91 = arith.constant 0 : index
    %123 = vector.load %arg5[%c0_90, %c0_91] : memref<5x32xf32, #tpu.memory_space<vmem>>, vector<5x32xf32>
    %cst_92 = arith.constant dense<0.000000e+00> : vector<1x32xf32>
    %124 = vector.multi_reduction <add>, %89, %cst_92 [1] : vector<1x8x32xf32> to vector<1x32xf32>
    %125 = vector.shape_cast %124 : vector<1x32xf32> to vector<1x1x32xf32>
    %126 = vector.extract_strided_slice %89 {offsets = [0, 7, 0], sizes = [1, 1, 32], strides = [1, 1, 1]} : vector<1x8x32xf32> to vector<1x1x32xf32>
    %127 = arith.subf %125, %126 : vector<1x1x32xf32>
    %128 = vector.extract_strided_slice %89 {offsets = [0, 6, 0], sizes = [1, 1, 32], strides = [1, 1, 1]} : vector<1x8x32xf32> to vector<1x1x32xf32>
    %129 = arith.subf %127, %128 : vector<1x1x32xf32>
    %130 = vector.extract_strided_slice %123 {offsets = [0, 0], sizes = [1, 32], strides = [1, 1]} : vector<5x32xf32> to vector<1x32xf32>
    %131 = vector.shape_cast %130 : vector<1x32xf32> to vector<1x1x32xf32>
    %132 = arith.mulf %129, %131 : vector<1x1x32xf32>
    %133 = vector.extract_strided_slice %89 {offsets = [0, 7, 0], sizes = [1, 1, 32], strides = [1, 1, 1]} : vector<1x8x32xf32> to vector<1x1x32xf32>
    %134 = arith.subf %125, %133 : vector<1x1x32xf32>
    %135 = vector.extract_strided_slice %123 {offsets = [1, 0], sizes = [1, 32], strides = [1, 1]} : vector<5x32xf32> to vector<1x32xf32>
    %136 = vector.shape_cast %135 : vector<1x32xf32> to vector<1x1x32xf32>
    %137 = arith.mulf %134, %136 : vector<1x1x32xf32>
    %138 = arith.addf %132, %137 : vector<1x1x32xf32>
    %139 = vector.extract_strided_slice %123 {offsets = [2, 0], sizes = [1, 32], strides = [1, 1]} : vector<5x32xf32> to vector<1x32xf32>
    %140 = vector.shape_cast %139 : vector<1x32xf32> to vector<1x1x32xf32>
    %141 = arith.mulf %125, %140 : vector<1x1x32xf32>
    %142 = arith.addf %138, %141 : vector<1x1x32xf32>
    %143 = vector.extract_strided_slice %89 {offsets = [0, 0, 0], sizes = [1, 1, 32], strides = [1, 1, 1]} : vector<1x8x32xf32> to vector<1x1x32xf32>
    %144 = arith.subf %125, %143 : vector<1x1x32xf32>
    %145 = vector.extract_strided_slice %123 {offsets = [3, 0], sizes = [1, 32], strides = [1, 1]} : vector<5x32xf32> to vector<1x32xf32>
    %146 = vector.shape_cast %145 : vector<1x32xf32> to vector<1x1x32xf32>
    %147 = arith.mulf %144, %146 : vector<1x1x32xf32>
    %148 = arith.addf %142, %147 : vector<1x1x32xf32>
    %149 = vector.extract_strided_slice %89 {offsets = [0, 0, 0], sizes = [1, 1, 32], strides = [1, 1, 1]} : vector<1x8x32xf32> to vector<1x1x32xf32>
    %150 = arith.subf %125, %149 : vector<1x1x32xf32>
    %151 = vector.extract_strided_slice %89 {offsets = [0, 1, 0], sizes = [1, 1, 32], strides = [1, 1, 1]} : vector<1x8x32xf32> to vector<1x1x32xf32>
    %152 = arith.subf %150, %151 : vector<1x1x32xf32>
    %153 = vector.extract_strided_slice %123 {offsets = [4, 0], sizes = [1, 32], strides = [1, 1]} : vector<5x32xf32> to vector<1x32xf32>
    %154 = vector.shape_cast %153 : vector<1x32xf32> to vector<1x1x32xf32>
    %155 = arith.mulf %152, %154 : vector<1x1x32xf32>
    %156 = arith.addf %148, %155 : vector<1x1x32xf32>
    %cst_93 = arith.constant dense<0.000000e+00> : vector<1x1xf32>
    %157 = vector.multi_reduction <add>, %156, %cst_93 [2] : vector<1x1x32xf32> to vector<1x1xf32>
    %158 = vector.shape_cast %157 : vector<1x1xf32> to vector<1x1x1xf32>
    %cst_94 = arith.constant 1.250000e-01 : f32
    %159 = vector.broadcast %cst_94 : f32 to vector<1x1x1xf32>
    %160 = arith.mulf %158, %159 : vector<1x1x1xf32>
    %161 = vector.broadcast %91 : f32 to vector<1x1x1xf32>
    %162 = arith.addf %160, %161 : vector<1x1x1xf32>
    %163 = arith.negf %162 : vector<1x1x1xf32>
    %164 = math.exp %163 : vector<1x1x1xf32>
    %cst_95 = arith.constant 1.000000e+00 : f32
    %165 = vector.broadcast %cst_95 : f32 to vector<1x1x1xf32>
    %166 = arith.addf %165, %164 : vector<1x1x1xf32>
    %167 = arith.divf %165, %166 : vector<1x1x1xf32>
    %168 = vector.broadcast %90 : f32 to vector<1x8x32xf32>
    %169 = arith.addf %122, %168 : vector<1x8x32xf32>
    %170 = arith.subf %169, %89 : vector<1x8x32xf32>
    %171 = vector.broadcast %167 : vector<1x1x1xf32> to vector<1x8x32xf32>
    %172 = arith.mulf %171, %170 : vector<1x8x32xf32>
    %173 = arith.addf %89, %172 : vector<1x8x32xf32>
    %cst_96 = arith.constant 0.000000e+00 : f32
    %174 = vector.broadcast %cst_96 : f32 to vector<1x8x32xf32>
    %175 = arith.maximumf %173, %174 : vector<1x8x32xf32>
    %c0_97 = arith.constant 0 : index
    %c0_98 = arith.constant 0 : index
    %c0_99 = arith.constant 0 : index
    %176 = vector.load %arg7[%c0_97, %c0_98, %c0_99] : memref<1x8x32xf32, #tpu.memory_space<vmem>>, vector<1x8x32xf32>
    tpu.vector_store %arg7[%c0_97, %c0_98, %c0_99], %175 {strides = array<i32>} : memref<1x8x32xf32, #tpu.memory_space<vmem>>, vector<1x8x32xf32>,
    return
  }
  func.func @transform_0(%arg0: i32) -> (i32, i32, i32) {
    %c0_i32 = arith.constant 0 : i32
    %c0_i32_0 = arith.constant 0 : i32
    %c0_i32_1 = arith.constant 0 : i32
    return %arg0, %c0_i32, %c0_i32_0 : i32, i32, i32
  }
  func.func @transform_1(%arg0: i32) -> (i32, i32, i32) {
    %c0_i32 = arith.constant 0 : i32
    %c0_i32_0 = arith.constant 0 : i32
    %c0_i32_1 = arith.constant 0 : i32
    %c0_i32_2 = arith.constant 0 : i32
    return %c0_i32, %c0_i32_0, %c0_i32_1 : i32, i32, i32
  }
  func.func @transform_2(%arg0: i32) -> (i32, i32) {
    %c0_i32 = arith.constant 0 : i32
    %c0_i32_0 = arith.constant 0 : i32
    %c0_i32_1 = arith.constant 0 : i32
    return %c0_i32, %c0_i32_0 : i32, i32
  }
  func.func @transform_3(%arg0: i32) -> (i32, i32, i32) {
    %c0_i32 = arith.constant 0 : i32
    %c0_i32_0 = arith.constant 0 : i32
    %c0_i32_1 = arith.constant 0 : i32
    %c0_i32_2 = arith.constant 0 : i32
    return %c0_i32, %c0_i32_0, %c0_i32_1 : i32, i32, i32
  }
  func.func @transform_4(%arg0: i32) -> (i32, i32) {
    %c0_i32 = arith.constant 0 : i32
    %c0_i32_0 = arith.constant 0 : i32
    %c0_i32_1 = arith.constant 0 : i32
    return %c0_i32, %c0_i32_0 : i32, i32
  }
  func.func @transform_5(%arg0: i32) -> i32 {
    %c0_i32 = arith.constant 0 : i32
    %c0_i32_0 = arith.constant 0 : i32
    return %c0_i32 : i32
  }
  func.func @transform_6(%arg0: i32) -> (i32, i32, i32) {
    %c0_i32 = arith.constant 0 : i32
    %c0_i32_0 = arith.constant 0 : i32
    %c0_i32_1 = arith.constant 0 : i32
    return %arg0, %c0_i32, %c0_i32_0 : i32, i32, i32
  }
}

</mosaic_0001>

<llo_original>
// kernel: tpu_custom_call.1
$region0: #{tpu_custom_call.1}
  #allocation0 [shape = 'u32[]', space=smem, size = 0x4, offset = 0x4, fixed_abs, tag = 'smem constant byte address 0x4 - core index']
  #allocation1 [shape = 'u32[144,128]{1,0:T(1,128)}', space=vmem, size = 0x12000, scoped, tag = 'internal scratch']
  #allocation2 [shape = 'f32[1,12,32]{2,1,0:T(8,128)}', space=vmem, size = 0x2000, scoped, tag = 'scratch operand']
  %s0 = inlined_call_operand.hbm [shape: f32[2,8,32], index: 0, kind: input, shape index: {}]
  %s1 = inlined_call_operand.hbm [shape: f32[5,32,32], index: 1, kind: input, shape index: {}]
  %s2 = inlined_call_operand.hbm [shape: f32[5,32], index: 2, kind: input, shape index: {}]
  %s3 = inlined_call_operand.hbm [shape: f32[5,32,32], index: 3, kind: input, shape index: {}]
  %s4 = inlined_call_operand.vmem [shape: f32[5,32], index: 4, kind: input, shape index: {}]
  %s5 = inlined_call_operand.vmem [shape: f32[4], index: 5, kind: input, shape index: {}]
  %s6 = inlined_call_operand.hbm [shape: f32[2,8,32], index: 6, kind: output, shape index: {}]
  %s7 = sld [smem:[#allocation0]]
  $region77: #{tpu_custom_call.1} parent=0
    _
  %s9 = ssub.s32 1, %s7
  %s10 = scalar_select 0, %s9, %s7
  $region1: #{tpu_custom_call.1} parent=0
    #allocation3 [shape = 'u8[8192]{0}', space=vmem, size = 0x2000, scoped, tag = 'input window, operand 0']
    #allocation4 [shape = 's32[2]{0}', space=sflag, size = 0x8, scoped, tag = 'scoped memory for tpu_custom_call.1']
    #allocation5 [shape = 's32[2]{0}', space=sflag, size = 0x8, scoped, tag = 'scoped memory for tpu_custom_call.1']
    #allocation6 [shape = 's32[2]{0}', space=sflag, size = 0x8, scoped, tag = 'scoped memory for tpu_custom_call.1']
    #allocation7 [shape = 'u8[81920]{0}', space=vmem, size = 0x14000, scoped, tag = 'input window, operand 1, single buffered']
    #allocation8 [shape = 's32[1]{0}', space=sflag, size = 0x4, scoped, tag = 'scoped memory for tpu_custom_call.1']
    #allocation9 [shape = 'u8[4096]{0}', space=vmem, size = 0x1000, scoped, tag = 'input window, operand 2, single buffered']
    #allocation10 [shape = 'u8[81920]{0}', space=vmem, size = 0x14000, scoped, tag = 'input window, operand 3, single buffered']
    #allocation11 [shape = 's32[1]{0}', space=sflag, size = 0x4, scoped, tag = 'scoped memory for tpu_custom_call.1']
    #allocation12 [shape = 'u8[512]{0}', space=smem, size = 0x200, scoped, tag = 'input window, operand 5, single buffered']
    #allocation13 [shape = 'u8[8192]{0}', space=vmem, size = 0x2000, scoped, tag = 'output window, operand 0']
    %11 = vsyncpa [#allocation4], 0
    %s12 = scalar_lea.sflag [#allocation4], 1
    %13 = vsyncpa %s12, 0
    %14 = vsyncpa [#allocation8], 0
    %15 = vsyncpa [#allocation11], 0
    %16 = vsyncpa [#allocation6], 0
    %17 = vsyncpa [#allocation5], 0
    %s18 = scalar_lea.sflag [#allocation5], 1
    %19 = vsyncpa %s18, 0
    loop: start=0, step=1, limit=4
    $region2: #{tpu_custom_call.1} parent=1 // loop_pre_header
      _
    $region3: #{tpu_custom_call.1} parent=1 // loop_header
      %s21 = sphi 0, %s25
      %p22 = scmp.ge.s32.totalorder %s21, 4
      %s31 = sphi 0, %s33
      %s34 = sphi 0, %s31
      %s35 = sphi 0, %s34
      %s51 = sphi 0, %s35
      %s55 = sphi 0, %s55
      %s57 = sphi 0, %s55
      %s58 = sphi 0, %s57
      %s72 = sphi 0, %s58
      %s76 = sphi 0, %s76
      %s78 = sphi 0, %s76
      %s79 = sphi 0, %s78
      %s93 = sphi 0, %s79
      %s97 = sphi 0, %s97
      %s99 = sphi 0, %s97
      %s100 = sphi 0, %s99
      %s114 = sphi 0, %s100
      %s118 = sphi 0, %s118
      %s120 = sphi 0, %s118
      %s121 = sphi 0, %s120
      %s135 = sphi 0, %s121
      %s139 = sphi 0, %s139
      %s141 = sphi 0, %s139
      %s142 = sphi 0, %s141
      %s156 = sphi 0, %s142
      %s162 = sphi 0, %s164
      %s165 = sphi 0, %s162
      %s166 = sphi 0, %s165
      %s182 = sphi 0, %s166
    $region4: #{tpu_custom_call.1} parent=1 // loop_header_branch
      %24 = sbr.rel (%p22) target = $region8
    $region5: #{tpu_custom_call.1} parent=1 // loop_body
      %s26 = ssub.s32 %s21, 1
      %s27 = ssub.s32 %s21, 2
      %s28 = sadd.s32 %s21, 1
      %s29 = ssub.s32 %s21, %s28
      %p30 = scmp.eq.s32.totalorder %s29, 0
      %s32 = sadd.s32 %s31, 1
      %s33 = scalar_select %p30, %s31, %s32
      %p36 = pneg %p30
      %p37 = scmp.eq.s32.totalorder %s21, 1
      %p38 = por %p36, %p37
      %p39 = scmp.ne.s32.totalorder %s31, %s34
      %p40 = scmp.eq.s32.totalorder %s21, 0
      %p41 = por %p39, %p40
      %p42 = scmp.ne.s32.totalorder %s31, %s34
      %p43 = scmp.eq.s32.totalorder %s26, 1
      %p44 = por %p42, %p43
      %p45 = scmp.ne.s32.totalorder %s34, %s35
      %p46 = scmp.eq.s32.totalorder %s26, 0
      %p47 = por %p45, %p46
      %p48 = scmp.ne.s32.totalorder %s34, %s35
      %p49 = scmp.eq.s32.totalorder %s27, 1
      %p50 = por %p48, %p49
      %p52 = scmp.ne.s32.totalorder %s35, %s51
      %p53 = scmp.eq.s32.totalorder %s27, 0
      %p54 = por %p52, %p53
      %s56 = sadd.s32 %s55, 1
      %p59 = scmp.eq.s32.totalorder %s21, 1
      %p60 = scmp.ne.s32.totalorder %s55, %s57
      %p61 = scmp.eq.s32.totalorder %s21, 0
      %p62 = por %p60, %p61
      %p63 = scmp.ne.s32.totalorder %s55, %s57
      %p64 = scmp.eq.s32.totalorder %s26, 1
      %p65 = por %p63, %p64
      %p66 = scmp.ne.s32.totalorder %s57, %s58
      %p67 = scmp.eq.s32.totalorder %s26, 0
      %p68 = por %p66, %p67
      %p69 = scmp.ne.s32.totalorder %s57, %s58
      %p70 = scmp.eq.s32.totalorder %s27, 1
      %p71 = por %p69, %p70
      %p73 = scmp.ne.s32.totalorder %s58, %s72
      %p74 = scmp.eq.s32.totalorder %s27, 0
      %p75 = por %p73, %p74
      %s77 = sadd.s32 %s76, 1
      %p80 = scmp.eq.s32.totalorder %s21, 1
      %p81 = scmp.ne.s32.totalorder %s76, %s78
      %p82 = scmp.eq.s32.totalorder %s21, 0
      %p83 = por %p81, %p82
      %p84 = scmp.ne.s32.totalorder %s76, %s78
      %p85 = scmp.eq.s32.totalorder %s26, 1
      %p86 = por %p84, %p85
      %p87 = scmp.ne.s32.totalorder %s78, %s79
      %p88 = scmp.eq.s32.totalorder %s26, 0
      %p89 = por %p87, %p88
      %p90 = scmp.ne.s32.totalorder %s78, %s79
      %p91 = scmp.eq.s32.totalorder %s27, 1
      %p92 = por %p90, %p91
      %p94 = scmp.ne.s32.totalorder %s79, %s93
      %p95 = scmp.eq.s32.totalorder %s27, 0
      %p96 = por %p94, %p95
      %s98 = sadd.s32 %s97, 1
      %p101 = scmp.eq.s32.totalorder %s21, 1
      %p102 = scmp.ne.s32.totalorder %s97, %s99
      %p103 = scmp.eq.s32.totalorder %s21, 0
      %p104 = por %p102, %p103
      %p105 = scmp.ne.s32.totalorder %s97, %s99
      %p106 = scmp.eq.s32.totalorder %s26, 1
      %p107 = por %p105, %p106
      %p108 = scmp.ne.s32.totalorder %s99, %s100
      %p109 = scmp.eq.s32.totalorder %s26, 0
      %p110 = por %p108, %p109
      %p111 = scmp.ne.s32.totalorder %s99, %s100
      %p112 = scmp.eq.s32.totalorder %s27, 1
      %p113 = por %p111, %p112
      %p115 = scmp.ne.s32.totalorder %s100, %s114
      %p116 = scmp.eq.s32.totalorder %s27, 0
      %p117 = por %p115, %p116
      %s119 = sadd.s32 %s118, 1
      %p122 = scmp.eq.s32.totalorder %s21, 1
      %p123 = scmp.ne.s32.totalorder %s118, %s120
      %p124 = scmp.eq.s32.totalorder %s21, 0
      %p125 = por %p123, %p124
      %p126 = scmp.ne.s32.totalorder %s118, %s120
      %p127 = scmp.eq.s32.totalorder %s26, 1
      %p128 = por %p126, %p127
      %p129 = scmp.ne.s32.totalorder %s120, %s121
      %p130 = scmp.eq.s32.totalorder %s26, 0
      %p131 = por %p129, %p130
      %p132 = scmp.ne.s32.totalorder %s120, %s121
      %p133 = scmp.eq.s32.totalorder %s27, 1
      %p134 = por %p132, %p133
      %p136 = scmp.ne.s32.totalorder %s121, %s135
      %p137 = scmp.eq.s32.totalorder %s27, 0
      %p138 = por %p136, %p137
      %s140 = sadd.s32 %s139, 1
      %p143 = scmp.eq.s32.totalorder %s21, 1
      %p144 = scmp.ne.s32.totalorder %s139, %s141
      %p145 = scmp.eq.s32.totalorder %s21, 0
      %p146 = por %p144, %p145
      %p147 = scmp.ne.s32.totalorder %s139, %s141
      %p148 = scmp.eq.s32.totalorder %s26, 1
      %p149 = por %p147, %p148
      %p150 = scmp.ne.s32.totalorder %s141, %s142
      %p151 = scmp.eq.s32.totalorder %s26, 0
      %p152 = por %p150, %p151
      %p153 = scmp.ne.s32.totalorder %s141, %s142
      %p154 = scmp.eq.s32.totalorder %s27, 1
      %p155 = por %p153, %p154
      %p157 = scmp.ne.s32.totalorder %s142, %s156
      %p158 = scmp.eq.s32.totalorder %s27, 0
      %p159 = por %p157, %p158
      %s160 = ssub.s32 %s21, %s28
      %p161 = scmp.eq.s32.totalorder %s160, 0
      %s163 = sadd.s32 %s162, 1
      %s164 = scalar_select %p161, %s162, %s163
      %p167 = pneg %p161
      %p168 = scmp.eq.s32.totalorder %s21, 1
      %p169 = por %p167, %p168
      %p170 = scmp.ne.s32.totalorder %s162, %s165
      %p171 = scmp.eq.s32.totalorder %s21, 0
      %p172 = por %p170, %p171
      %p173 = scmp.ne.s32.totalorder %s162, %s165
      %p174 = scmp.eq.s32.totalorder %s26, 1
      %p175 = por %p173, %p174
      %p176 = scmp.ne.s32.totalorder %s165, %s166
      %p177 = scmp.eq.s32.totalorder %s26, 0
      %p178 = por %p176, %p177
      %p179 = scmp.ne.s32.totalorder %s165, %s166
      %p180 = scmp.eq.s32.totalorder %s27, 1
      %p181 = por %p179, %p180
      %p183 = scmp.ne.s32.totalorder %s166, %s182
      %p184 = scmp.eq.s32.totalorder %s27, 0
      %p185 = por %p183, %p184
      %p186 = scmp.le.s32.totalorder 1, %s21
      %p187 = scmp.lt.s32.totalorder %s21, 3
      %p188 = pnand %p186, %p187
      %p189 = pneg %p188
      // Predicated region
      $region9: #{tpu_custom_call.1} parent=5 // pred_check
        _
      $region10: #{tpu_custom_call.1} parent=5 // pred_check_branch
        %191 = sbr.rel (%p188) target = $region12
      $region11: #{tpu_custom_call.1} parent=5 // pred_region
        %s192 = ssub.s32 %s21, 1
        // Predicated region
        $region13: #{tpu_custom_call.1} parent=11 // pred_check
          %p193 = pneg %p68
        $region14: #{tpu_custom_call.1} parent=11 // pred_check_branch
          %195 = sbr.rel (%p193) target = $region16
        $region15: #{tpu_custom_call.1} parent=11 // pred_region
          %s197 = ssub.s32 2560, 2560
          %198 = vsyncadd [#allocation8], %s197
          %s199 = sshll.u32 [#allocation7], 4
          %s200 = int_to_ptr.vmem [resolvable:$true] %s199
          %205 = dma.hbm_to_vmem [thread:$0]  %s1, 2560, %s200, [#allocation8], 128, 128, 8
        $region16: #{tpu_custom_call.1} parent=11 // pred_fallthru
          _
        // Predicated region
        $region17: #{tpu_custom_call.1} parent=11 // pred_check
          %p206 = pneg %p89
        $region18: #{tpu_custom_call.1} parent=11 // pred_check_branch
          %208 = sbr.rel (%p206) target = $region20
        $region19: #{tpu_custom_call.1} parent=11 // pred_region
          %s210 = ssub.s32 128, 128
          %211 = vsyncadd [#allocation8], %s210
          %s213 = sshll.u32 [#allocation9], 4
          %s214 = int_to_ptr.vmem [resolvable:$true] %s213
          %216 = dma.hbm_to_vmem [thread:$0]  %s2, 128, %s214, [#allocation8]
        $region20: #{tpu_custom_call.1} parent=11 // pred_fallthru
          _
        // Predicated region
        $region21: #{tpu_custom_call.1} parent=11 // pred_check
          %p217 = pneg %p110
        $region22: #{tpu_custom_call.1} parent=11 // pred_check_branch
          %219 = sbr.rel (%p217) target = $region24
        $region23: #{tpu_custom_call.1} parent=11 // pred_region
          %s221 = ssub.s32 2560, 2560
          %222 = vsyncadd [#allocation11], %s221
          %s223 = sshll.u32 [#allocation10], 4
          %s224 = int_to_ptr.vmem [resolvable:$true] %s223
          %229 = dma.hbm_to_vmem [thread:$0]  %s3, 2560, %s224, [#allocation11], 128, 128, 8
        $region24: #{tpu_custom_call.1} parent=11 // pred_fallthru
          _
        // Predicated region
        $region25: #{tpu_custom_call.1} parent=11 // pred_check
          %p230 = pneg %p131
        $region26: #{tpu_custom_call.1} parent=11 // pred_check_branch
          %232 = sbr.rel (%p230) target = $region28
        $region27: #{tpu_custom_call.1} parent=11 // pred_region
          _
        $region28: #{tpu_custom_call.1} parent=11 // pred_fallthru
          _
        // Predicated region
        $region29: #{tpu_custom_call.1} parent=11 // pred_check
          %p233 = pneg %p152
        $region30: #{tpu_custom_call.1} parent=11 // pred_check_branch
          %235 = sbr.rel (%p233) target = $region32
        $region31: #{tpu_custom_call.1} parent=11 // pred_region
          %s237 = ssub.s32 16, 16
          %238 = vsyncadd [#allocation6], %s237
          %s240 = sshll.u32 %s5, 4
          %s241 = int_to_ptr.vmem [resolvable:$true] %s240
          %243 = dma.vmem_to_smem %s241, 16, [#allocation12], [#allocation6]
        $region32: #{tpu_custom_call.1} parent=11 // pred_fallthru
          _
      $region12: #{tpu_custom_call.1} parent=5 // pred_fallthru
        _
      %p244 = scmp.lt.s32.totalorder %s21, 2
      // Predicated region
      $region33: #{tpu_custom_call.1} parent=5 // pred_check
        %p245 = pneg %p244
      $region34: #{tpu_custom_call.1} parent=5 // pred_check_branch
        %247 = sbr.rel (%p245) target = $region36
      $region35: #{tpu_custom_call.1} parent=5 // pred_region
        // Predicated region
        $region37: #{tpu_custom_call.1} parent=35 // pred_check
          %p248 = pneg %p41
        $region38: #{tpu_custom_call.1} parent=35 // pred_check_branch
          %250 = sbr.rel (%p248) target = $region40
        $region39: #{tpu_custom_call.1} parent=35 // pred_region
          %s251 = sand.u32 %s31, 1
          %s252 = scalar_lea.sflag [#allocation4], %s251
          %s253 = sand.u32 %s31, 1
          %s254 = smul.addr %s253, 8
          %s255 = scalar_lea.vmem [#allocation3], %s254
          %s257 = ssub.s32 128, 128
          %258 = vsyncadd %s252, %s257
          %s259 = smul.addr %s21, 128
          %s260 = scalar_lea.hbm %s0, %s259
          %s262 = sshll.u32 %s255, 4
          %s263 = int_to_ptr.vmem [resolvable:$true] %s262
          %265 = dma.hbm_to_vmem [thread:$0]  %s260, 128, %s263, %s252
        $region40: #{tpu_custom_call.1} parent=35 // pred_fallthru
          _
      $region36: #{tpu_custom_call.1} parent=5 // pred_fallthru
        _
      %p266 = scmp.le.s32.totalorder 1, %s21
      %p267 = scmp.lt.s32.totalorder %s21, 3
      %p268 = pnand %p266, %p267
      %p269 = pneg %p268
      // Predicated region
      $region41: #{tpu_custom_call.1} parent=5 // pred_check
        _
      $region42: #{tpu_custom_call.1} parent=5 // pred_check_branch
        %271 = sbr.rel (%p268) target = $region44
      $region43: #{tpu_custom_call.1} parent=5 // pred_region
        %s272 = ssub.s32 %s21, 1
        %s273 = sand.u32 %s34, 1
        %s274 = scalar_lea.sflag [#allocation4], %s273
        %s275 = sand.u32 %s34, 1
        %s276 = smul.addr %s275, 8
        %s277 = scalar_lea.vmem [#allocation3], %s276
        // Predicated region
        $region45: #{tpu_custom_call.1} parent=43 // pred_check
          %p278 = pneg %p47
        $region46: #{tpu_custom_call.1} parent=43 // pred_check_branch
          %280 = sbr.rel (%p278) target = $region48
        $region47: #{tpu_custom_call.1} parent=43 // pred_region
          %281 = dma.done %s274, 128
        $region48: #{tpu_custom_call.1} parent=43 // pred_fallthru
          _
        // Predicated region
        $region49: #{tpu_custom_call.1} parent=43 // pred_check
          %p282 = pneg %p68
        $region50: #{tpu_custom_call.1} parent=43 // pred_check_branch
          %284 = sbr.rel (%p282) target = $region52
        $region51: #{tpu_custom_call.1} parent=43 // pred_region
          %285 = dma.done [#allocation8], 2560
        $region52: #{tpu_custom_call.1} parent=43 // pred_fallthru
          _
        // Predicated region
        $region53: #{tpu_custom_call.1} parent=43 // pred_check
          %p286 = pneg %p89
        $region54: #{tpu_custom_call.1} parent=43 // pred_check_branch
          %288 = sbr.rel (%p286) target = $region56
        $region55: #{tpu_custom_call.1} parent=43 // pred_region
          %289 = dma.done [#allocation8], 128
        $region56: #{tpu_custom_call.1} parent=43 // pred_fallthru
          _
        // Predicated region
        $region57: #{tpu_custom_call.1} parent=43 // pred_check
          %p290 = pneg %p110
        $region58: #{tpu_custom_call.1} parent=43 // pred_check_branch
          %292 = sbr.rel (%p290) target = $region60
        $region59: #{tpu_custom_call.1} parent=43 // pred_region
          %293 = dma.done [#allocation11], 2560
        $region60: #{tpu_custom_call.1} parent=43 // pred_fallthru
          _
        // Predicated region
        $region61: #{tpu_custom_call.1} parent=43 // pred_check
          %p294 = pneg %p152
        $region62: #{tpu_custom_call.1} parent=43 // pred_check_branch
          %296 = sbr.rel (%p294) target = $region64
        $region63: #{tpu_custom_call.1} parent=43 // pred_region
          %297 = dma.done [#allocation6], 16
        $region64: #{tpu_custom_call.1} parent=43 // pred_fallthru
          _
        %298 = sfence
        %s299 = sand.u32 %s34, 1
        %s300 = scalar_lea.sflag [#allocation4], %s299
        %s301 = sand.u32 %s34, 1
        %s302 = smul.addr %s301, 8
        %s303 = scalar_lea.vmem [#allocation3], %s302
        %p304 = pneg %p47
        %p305 = pneg %p44
        %p306 = pneg %p68
        %p307 = pneg %p65
        %p308 = pneg %p89
        %p309 = pneg %p86
        %p310 = pneg %p110
        %p311 = pneg %p107
        %p312 = pneg %p131
        %p313 = pneg %p128
        %p314 = pneg %p152
        %p315 = pneg %p149
        %p316 = pneg %p178
        %p317 = pneg %p175
        %s318 = sand.u32 %s165, 1
        %s319 = scalar_lea.sflag [#allocation5], %s318
        %s320 = sand.u32 %s165, 1
        %s321 = smul.addr %s320, 8
        %s322 = scalar_lea.vmem [#allocation13], %s321
        %vm323 = vcmask 254976
        %324 = vst.msk [vmem:[#allocation2] sm:$0x3] %vm323, 0.0
        %325 = vst.msk [vmem:[#allocation2 + $0xa] sm:$0x3] %vm323, 0.0
        %v326 = vld [vmem:[%s277] sm:$0xff]
        %s327 = sld [smem:[#allocation12]]
        %s328 = sld [smem:[#allocation12 + $0x1]]
        %vm329 = vcmask 261120
        %330 = vst.msk [vmem:[#allocation2 + $0x2] sm:$0xff] %vm329, %v326
        %v331 = vld [vmem:[#allocation2] sm:$0xff]
        %v332 = vld [vmem:[#allocation7] sm:$0xff]
        %v333 = vld [vmem:[#allocation7 + $0x8] sm:$0xff]
        %v334 = vld [vmem:[#allocation7 + $0x10] sm:$0xff]
        %v335 = vld [vmem:[#allocation7 + $0x18] sm:$0xff]
        %v336 = vld [vmem:[#allocation2 + $0x1] sm:$0xff]
        %s337 = scalar_lea.vmem [#allocation7], 32
        %v338 = vld [vmem:[%s337] sm:$0xff]
        %v339 = vld [vmem:[%s337 + $0x8] sm:$0xff]
        %v340 = vld [vmem:[%s337 + $0x10] sm:$0xff]
        %v341 = vld [vmem:[%s337 + $0x18] sm:$0xff]
        %v343 = vsel %vm329, %v336, 0
        %345 = vmatprep.subr.mxu0 0.0
        %346 = vmatpush1.msra.mxu0 %v338
        %347 = vmatprep.subr.mxu0 0.0
        %348 = vmatpush1.msra.mxu0 %v339
        %349 = vmatprep.subr.mxu0 0.0
        %350 = vmatpush1.msra.mxu0 %v340
        %351 = vmatprep.subr.mxu0 0.0
        %352 = vmatpush1.msra.mxu0 %v341
        %353 = vmatprep.subr.mxu0 0.0
        %354 = vmatpush1.msra.mxu0 0.0
        %355 = vmatprep.subr.mxu0 0.0
        %356 = vmatpush1.msra.mxu0 0.0
        %357 = vmatprep.subr.mxu0 0.0
        %358 = vmatpush1.msra.mxu0 0.0
        %359 = vmatprep.subr.mxu0 0.0
        %360 = vmatpush1.msra.mxu0 0.0
        %361 = vmatprep.subr.mxu0 0.0
        %362 = vmatpush1.msra.mxu0 0.0
        %363 = vmatprep.subr.mxu0 0.0
        %364 = vmatpush1.msra.mxu0 0.0
        %365 = vmatprep.subr.mxu0 0.0
        %366 = vmatpush1.msra.mxu0 0.0
        %367 = vmatprep.subr.mxu0 0.0
        %368 = vmatpush1.msra.mxu0 0.0
        %369 = vmatprep.subr.mxu0 0.0
        %370 = vmatpush1.msra.mxu0 0.0
        %371 = vmatprep.subr.mxu0 0.0
        %372 = vmatpush1.msra.mxu0 0.0
        %373 = vmatprep.subr.mxu0 0.0
        %374 = vmatpush1.msra.mxu0 0.0
        %375 = vmatprep.subr.mxu0 0.0
        %376 = vmatpush1.msra.mxu0 0.0
        %377 = vmatprep.subr.mxu0 0.0
        %378 = vmatpush1.msra.mxu0 0.0
        %379 = vmatprep.subr.mxu0 0.0
        %380 = vmatpush1.msra.mxu0 0.0
        %381 = vmatprep.subr.mxu0 0.0
        %382 = vmatpush1.msra.mxu0 0.0
        %383 = vmatprep.subr.mxu0 0.0
        %384 = vmatpush1.msra.mxu0 0.0
        %385 = vmatprep.subr.mxu0 0.0
        %386 = vmatpush1.msra.mxu0 0.0
        %387 = vmatprep.subr.mxu0 0.0
        %388 = vmatpush1.msra.mxu0 0.0
        %389 = vmatprep.subr.mxu0 0.0
        %390 = vmatpush1.msra.mxu0 0.0
        %391 = vmatprep.subr.mxu0 0.0
        %392 = vmatpush1.msra.mxu0 0.0
        %393 = vmatprep.subr.mxu0 0.0
        %394 = vmatpush1.msra.mxu0 0.0
        %395 = vmatprep.subr.mxu0 0.0
        %396 = vmatpush1.msra.mxu0 0.0
        %397 = vmatprep.subr.mxu0 0.0
        %398 = vmatpush1.msra.mxu0 0.0
        %399 = vmatprep.subr.mxu0 0.0
        %400 = vmatpush1.msra.mxu0 0.0
        %401 = vmatprep.subr.mxu0 0.0
        %402 = vmatpush1.msra.mxu0 0.0
        %403 = vmatprep.subr.mxu0 0.0
        %404 = vmatpush1.msra.mxu0 0.0
        %405 = vmatprep.subr.mxu0 0.0
        %406 = vmatpush1.msra.mxu0 0.0
        %407 = vmatprep.subr.mxu0 0.0
        %408 = vmatpush1.msra.mxu0 0.0
        %409 = vmatprep.mubr.f32.mxu0 0.0
        %410 = vmatmul.mubr.f32.gmra.mrb[0].mxu0 %v343
        %v411 = vpop.f32.mrb[0].mxu0
        %v412 = vadd.f32 0.0, %v411
        %v413 = vpop.f32.mrb[0].mxu0
        %414 = vdwg.mxu0
        %v416 = vsel %vm329, %v331, 0
        %418 = vmatprep.subr.mxu0 0.0
        %419 = vmatpush1.msra.mxu0 %v332
        %420 = vmatprep.subr.mxu0 0.0
        %421 = vmatpush1.msra.mxu0 %v333
        %422 = vmatprep.subr.mxu0 0.0
        %423 = vmatpush1.msra.mxu0 %v334
        %424 = vmatprep.subr.mxu0 0.0
        %425 = vmatpush1.msra.mxu0 %v335
        %426 = vmatprep.subr.mxu0 0.0
        %427 = vmatpush1.msra.mxu0 0.0
        %428 = vmatprep.subr.mxu0 0.0
        %429 = vmatpush1.msra.mxu0 0.0
        %430 = vmatprep.subr.mxu0 0.0
        %431 = vmatpush1.msra.mxu0 0.0
        %432 = vmatprep.subr.mxu0 0.0
        %433 = vmatpush1.msra.mxu0 0.0
        %434 = vmatprep.subr.mxu0 0.0
        %435 = vmatpush1.msra.mxu0 0.0
        %436 = vmatprep.subr.mxu0 0.0
        %437 = vmatpush1.msra.mxu0 0.0
        %438 = vmatprep.subr.mxu0 0.0
        %439 = vmatpush1.msra.mxu0 0.0
        %440 = vmatprep.subr.mxu0 0.0
        %441 = vmatpush1.msra.mxu0 0.0
        %442 = vmatprep.subr.mxu0 0.0
        %443 = vmatpush1.msra.mxu0 0.0
        %444 = vmatprep.subr.mxu0 0.0
        %445 = vmatpush1.msra.mxu0 0.0
        %446 = vmatprep.subr.mxu0 0.0
        %447 = vmatpush1.msra.mxu0 0.0
        %448 = vmatprep.subr.mxu0 0.0
        %449 = vmatpush1.msra.mxu0 0.0
        %450 = vmatprep.subr.mxu0 0.0
        %451 = vmatpush1.msra.mxu0 0.0
        %452 = vmatprep.subr.mxu0 0.0
        %453 = vmatpush1.msra.mxu0 0.0
        %454 = vmatprep.subr.mxu0 0.0
        %455 = vmatpush1.msra.mxu0 0.0
        %456 = vmatprep.subr.mxu0 0.0
        %457 = vmatpush1.msra.mxu0 0.0
        %458 = vmatprep.subr.mxu0 0.0
        %459 = vmatpush1.msra.mxu0 0.0
        %460 = vmatprep.subr.mxu0 0.0
        %461 = vmatpush1.msra.mxu0 0.0
        %462 = vmatprep.subr.mxu0 0.0
        %463 = vmatpush1.msra.mxu0 0.0
        %464 = vmatprep.subr.mxu0 0.0
        %465 = vmatpush1.msra.mxu0 0.0
        %466 = vmatprep.subr.mxu0 0.0
        %467 = vmatpush1.msra.mxu0 0.0
        %468 = vmatprep.subr.mxu0 0.0
        %469 = vmatpush1.msra.mxu0 0.0
        %470 = vmatprep.subr.mxu0 0.0
        %471 = vmatpush1.msra.mxu0 0.0
        %472 = vmatprep.subr.mxu0 0.0
        %473 = vmatpush1.msra.mxu0 0.0
        %474 = vmatprep.subr.mxu0 0.0
        %475 = vmatpush1.msra.mxu0 0.0
        %476 = vmatprep.subr.mxu0 0.0
        %477 = vmatpush1.msra.mxu0 0.0
        %478 = vmatprep.subr.mxu0 0.0
        %479 = vmatpush1.msra.mxu0 0.0
        %480 = vmatprep.subr.mxu0 0.0
        %481 = vmatpush1.msra.mxu0 0.0
        %482 = vmatprep.mubr.f32.mxu0 0.0
        %483 = vmatmul.mubr.f32.gmra.mrb[0].mxu0 %v416
        %v484 = vpop.f32.mrb[0].mxu0
        %v485 = vadd.f32 %v412, %v484
        %v486 = vpop.f32.mrb[0].mxu0
        %487 = vdwg.mxu0
        %v488 = vld [vmem:[#allocation2 + $0x2] sm:$0xff]
        %s489 = scalar_lea.vmem [#allocation7], 64
        %v490 = vld [vmem:[%s489] sm:$0xff]
        %v491 = vld [vmem:[%s489 + $0x8] sm:$0xff]
        %v492 = vld [vmem:[%s489 + $0x10] sm:$0xff]
        %v493 = vld [vmem:[%s489 + $0x18] sm:$0xff]
        %v495 = vsel %vm329, %v488, 0
        %497 = vmatprep.subr.mxu0 0.0
        %498 = vmatpush1.msra.mxu0 %v490
        %499 = vmatprep.subr.mxu0 0.0
        %500 = vmatpush1.msra.mxu0 %v491
        %501 = vmatprep.subr.mxu0 0.0
        %502 = vmatpush1.msra.mxu0 %v492
        %503 = vmatprep.subr.mxu0 0.0
        %504 = vmatpush1.msra.mxu0 %v493
        %505 = vmatprep.subr.mxu0 0.0
        %506 = vmatpush1.msra.mxu0 0.0
        %507 = vmatprep.subr.mxu0 0.0
        %508 = vmatpush1.msra.mxu0 0.0
        %509 = vmatprep.subr.mxu0 0.0
        %510 = vmatpush1.msra.mxu0 0.0
        %511 = vmatprep.subr.mxu0 0.0
        %512 = vmatpush1.msra.mxu0 0.0
        %513 = vmatprep.subr.mxu0 0.0
        %514 = vmatpush1.msra.mxu0 0.0
        %515 = vmatprep.subr.mxu0 0.0
        %516 = vmatpush1.msra.mxu0 0.0
        %517 = vmatprep.subr.mxu0 0.0
        %518 = vmatpush1.msra.mxu0 0.0
        %519 = vmatprep.subr.mxu0 0.0
        %520 = vmatpush1.msra.mxu0 0.0
        %521 = vmatprep.subr.mxu0 0.0
        %522 = vmatpush1.msra.mxu0 0.0
        %523 = vmatprep.subr.mxu0 0.0
        %524 = vmatpush1.msra.mxu0 0.0
        %525 = vmatprep.subr.mxu0 0.0
        %526 = vmatpush1.msra.mxu0 0.0
        %527 = vmatprep.subr.mxu0 0.0
        %528 = vmatpush1.msra.mxu0 0.0
        %529 = vmatprep.subr.mxu0 0.0
        %530 = vmatpush1.msra.mxu0 0.0
        %531 = vmatprep.subr.mxu0 0.0
        %532 = vmatpush1.msra.mxu0 0.0
        %533 = vmatprep.subr.mxu0 0.0
        %534 = vmatpush1.msra.mxu0 0.0
        %535 = vmatprep.subr.mxu0 0.0
        %536 = vmatpush1.msra.mxu0 0.0
        %537 = vmatprep.subr.mxu0 0.0
        %538 = vmatpush1.msra.mxu0 0.0
        %539 = vmatprep.subr.mxu0 0.0
        %540 = vmatpush1.msra.mxu0 0.0
        %541 = vmatprep.subr.mxu0 0.0
        %542 = vmatpush1.msra.mxu0 0.0
        %543 = vmatprep.subr.mxu0 0.0
        %544 = vmatpush1.msra.mxu0 0.0
        %545 = vmatprep.subr.mxu0 0.0
        %546 = vmatpush1.msra.mxu0 0.0
        %547 = vmatprep.subr.mxu0 0.0
        %548 = vmatpush1.msra.mxu0 0.0
        %549 = vmatprep.subr.mxu0 0.0
        %550 = vmatpush1.msra.mxu0 0.0
        %551 = vmatprep.subr.mxu0 0.0
        %552 = vmatpush1.msra.mxu0 0.0
        %553 = vmatprep.subr.mxu0 0.0
        %554 = vmatpush1.msra.mxu0 0.0
        %555 = vmatprep.subr.mxu0 0.0
        %556 = vmatpush1.msra.mxu0 0.0
        %557 = vmatprep.subr.mxu0 0.0
        %558 = vmatpush1.msra.mxu0 0.0
        %559 = vmatprep.subr.mxu0 0.0
        %560 = vmatpush1.msra.mxu0 0.0
        %561 = vmatprep.mubr.f32.mxu0 0.0
        %562 = vmatmul.mubr.f32.gmra.mrb[0].mxu0 %v495
        %v563 = vpop.f32.mrb[0].mxu0
        %v564 = vadd.f32 0.0, %v563
        %v565 = vpop.f32.mrb[0].mxu0
        %566 = vdwg.mxu0
        %v567 = vadd.f32 %v485, %v564
        %v568 = vld [vmem:[#allocation2 + $0x3] sm:$0xff]
        %s569 = scalar_lea.vmem [#allocation7], 96
        %v570 = vld [vmem:[%s569] sm:$0xff]
        %v571 = vld [vmem:[%s569 + $0x8] sm:$0xff]
        %v572 = vld [vmem:[%s569 + $0x10] sm:$0xff]
        %v573 = vld [vmem:[%s569 + $0x18] sm:$0xff]
        %v575 = vsel %vm329, %v568, 0
        %577 = vmatprep.subr.mxu0 0.0
        %578 = vmatpush1.msra.mxu0 %v570
        %579 = vmatprep.subr.mxu0 0.0
        %580 = vmatpush1.msra.mxu0 %v571
        %581 = vmatprep.subr.mxu0 0.0
        %582 = vmatpush1.msra.mxu0 %v572
        %583 = vmatprep.subr.mxu0 0.0
        %584 = vmatpush1.msra.mxu0 %v573
        %585 = vmatprep.subr.mxu0 0.0
        %586 = vmatpush1.msra.mxu0 0.0
        %587 = vmatprep.subr.mxu0 0.0
        %588 = vmatpush1.msra.mxu0 0.0
        %589 = vmatprep.subr.mxu0 0.0
        %590 = vmatpush1.msra.mxu0 0.0
        %591 = vmatprep.subr.mxu0 0.0
        %592 = vmatpush1.msra.mxu0 0.0
        %593 = vmatprep.subr.mxu0 0.0
        %594 = vmatpush1.msra.mxu0 0.0
        %595 = vmatprep.subr.mxu0 0.0
        %596 = vmatpush1.msra.mxu0 0.0
        %597 = vmatprep.subr.mxu0 0.0
        %598 = vmatpush1.msra.mxu0 0.0
        %599 = vmatprep.subr.mxu0 0.0
        %600 = vmatpush1.msra.mxu0 0.0
        %601 = vmatprep.subr.mxu0 0.0
        %602 = vmatpush1.msra.mxu0 0.0
        %603 = vmatprep.subr.mxu0 0.0
        %604 = vmatpush1.msra.mxu0 0.0
        %605 = vmatprep.subr.mxu0 0.0
        %606 = vmatpush1.msra.mxu0 0.0
        %607 = vmatprep.subr.mxu0 0.0
        %608 = vmatpush1.msra.mxu0 0.0
        %609 = vmatprep.subr.mxu0 0.0
        %610 = vmatpush1.msra.mxu0 0.0
        %611 = vmatprep.subr.mxu0 0.0
        %612 = vmatpush1.msra.mxu0 0.0
        %613 = vmatprep.subr.mxu0 0.0
        %614 = vmatpush1.msra.mxu0 0.0
        %615 = vmatprep.subr.mxu0 0.0
        %616 = vmatpush1.msra.mxu0 0.0
        %617 = vmatprep.subr.mxu0 0.0
        %618 = vmatpush1.msra.mxu0 0.0
        %619 = vmatprep.subr.mxu0 0.0
        %620 = vmatpush1.msra.mxu0 0.0
        %621 = vmatprep.subr.mxu0 0.0
        %622 = vmatpush1.msra.mxu0 0.0
        %623 = vmatprep.subr.mxu0 0.0
        %624 = vmatpush1.msra.mxu0 0.0
        %625 = vmatprep.subr.mxu0 0.0
        %626 = vmatpush1.msra.mxu0 0.0
        %627 = vmatprep.subr.mxu0 0.0
        %628 = vmatpush1.msra.mxu0 0.0
        %629 = vmatprep.subr.mxu0 0.0
        %630 = vmatpush1.msra.mxu0 0.0
        %631 = vmatprep.subr.mxu0 0.0
        %632 = vmatpush1.msra.mxu0 0.0
        %633 = vmatprep.subr.mxu0 0.0
        %634 = vmatpush1.msra.mxu0 0.0
        %635 = vmatprep.subr.mxu0 0.0
        %636 = vmatpush1.msra.mxu0 0.0
        %637 = vmatprep.subr.mxu0 0.0
        %638 = vmatpush1.msra.mxu0 0.0
        %639 = vmatprep.subr.mxu0 0.0
        %640 = vmatpush1.msra.mxu0 0.0
        %641 = vmatprep.mubr.f32.mxu0 0.0
        %642 = vmatmul.mubr.f32.gmra.mrb[0].mxu0 %v575
        %v643 = vpop.f32.mrb[0].mxu0
        %v644 = vadd.f32 0.0, %v643
        %v645 = vpop.f32.mrb[0].mxu0
        %646 = vdwg.mxu0
        %v647 = vadd.f32 %v567, %v644
        %v648 = vld [vmem:[#allocation2 + $0x4] sm:$0xff]
        %s649 = scalar_lea.vmem [#allocation7], 128
        %v650 = vld [vmem:[%s649] sm:$0xff]
        %v651 = vld [vmem:[%s649 + $0x8] sm:$0xff]
        %v652 = vld [vmem:[%s649 + $0x10] sm:$0xff]
        %v653 = vld [vmem:[%s649 + $0x18] sm:$0xff]
        %v655 = vsel %vm329, %v648, 0
        %657 = vmatprep.subr.mxu0 0.0
        %658 = vmatpush1.msra.mxu0 %v650
        %659 = vmatprep.subr.mxu0 0.0
        %660 = vmatpush1.msra.mxu0 %v651
        %661 = vmatprep.subr.mxu0 0.0
        %662 = vmatpush1.msra.mxu0 %v652
        %663 = vmatprep.subr.mxu0 0.0
        %664 = vmatpush1.msra.mxu0 %v653
        %665 = vmatprep.subr.mxu0 0.0
        %666 = vmatpush1.msra.mxu0 0.0
        %667 = vmatprep.subr.mxu0 0.0
        %668 = vmatpush1.msra.mxu0 0.0
        %669 = vmatprep.subr.mxu0 0.0
        %670 = vmatpush1.msra.mxu0 0.0
        %671 = vmatprep.subr.mxu0 0.0
        %672 = vmatpush1.msra.mxu0 0.0
        %673 = vmatprep.subr.mxu0 0.0
        %674 = vmatpush1.msra.mxu0 0.0
        %675 = vmatprep.subr.mxu0 0.0
        %676 = vmatpush1.msra.mxu0 0.0
        %677 = vmatprep.subr.mxu0 0.0
        %678 = vmatpush1.msra.mxu0 0.0
        %679 = vmatprep.subr.mxu0 0.0
        %680 = vmatpush1.msra.mxu0 0.0
        %681 = vmatprep.subr.mxu0 0.0
        %682 = vmatpush1.msra.mxu0 0.0
        %683 = vmatprep.subr.mxu0 0.0
        %684 = vmatpush1.msra.mxu0 0.0
        %685 = vmatprep.subr.mxu0 0.0
        %686 = vmatpush1.msra.mxu0 0.0
        %687 = vmatprep.subr.mxu0 0.0
        %688 = vmatpush1.msra.mxu0 0.0
        %689 = vmatprep.subr.mxu0 0.0
        %690 = vmatpush1.msra.mxu0 0.0
        %691 = vmatprep.subr.mxu0 0.0
        %692 = vmatpush1.msra.mxu0 0.0
        %693 = vmatprep.subr.mxu0 0.0
        %694 = vmatpush1.msra.mxu0 0.0
        %695 = vmatprep.subr.mxu0 0.0
        %696 = vmatpush1.msra.mxu0 0.0
        %697 = vmatprep.subr.mxu0 0.0
        %698 = vmatpush1.msra.mxu0 0.0
        %699 = vmatprep.subr.mxu0 0.0
        %700 = vmatpush1.msra.mxu0 0.0
        %701 = vmatprep.subr.mxu0 0.0
        %702 = vmatpush1.msra.mxu0 0.0
        %703 = vmatprep.subr.mxu0 0.0
        %704 = vmatpush1.msra.mxu0 0.0
        %705 = vmatprep.subr.mxu0 0.0
        %706 = vmatpush1.msra.mxu0 0.0
        %707 = vmatprep.subr.mxu0 0.0
        %708 = vmatpush1.msra.mxu0 0.0
        %709 = vmatprep.subr.mxu0 0.0
        %710 = vmatpush1.msra.mxu0 0.0
        %711 = vmatprep.subr.mxu0 0.0
        %712 = vmatpush1.msra.mxu0 0.0
        %713 = vmatprep.subr.mxu0 0.0
        %714 = vmatpush1.msra.mxu0 0.0
        %715 = vmatprep.subr.mxu0 0.0
        %716 = vmatpush1.msra.mxu0 0.0
        %717 = vmatprep.subr.mxu0 0.0
        %718 = vmatpush1.msra.mxu0 0.0
        %719 = vmatprep.subr.mxu0 0.0
        %720 = vmatpush1.msra.mxu0 0.0
        %721 = vmatprep.mubr.f32.mxu0 0.0
        %722 = vmatmul.mubr.f32.gmra.mrb[0].mxu0 %v655
        %v723 = vpop.f32.mrb[0].mxu0
        %v724 = vadd.f32 0.0, %v723
        %v725 = vpop.f32.mrb[0].mxu0
        %726 = vdwg.mxu0
        %v727 = vadd.f32 %v647, %v724
        %v728 = vld [vmem:[#allocation9] sm:$0x1f]
        %v729 = vsel %vm329, %v326, 0.0
        %v730 = vrot.slane %v729, 4
        %v731 = vadd.f32 %v729, %v730
        %v732 = vrot.slane %v731, 2
        %v733 = vadd.f32 %v731, %v732
        %v734 = vrot.slane %v733, 1
        %v735 = vadd.f32 %v733, %v734
        %v736 = vsub.f32 %v735, %v326
        %v738 = vrot.slane %v326, 7
        %v740 = vsub.f32 %v736, %v738
        %v742 = vrot.slane %v728, 1
        %v744 = vmul.f32 %v740, %v742
        %v745 = vrot.slane %v728, 2
        %v747 = vmul.f32 %v736, %v745
        %v748 = vadd.f32 %v744, %v747
        %v749 = vmul.f32 %v735, %v728
        %v751 = vrot.slane %v749, 3
        %v753 = vadd.f32 %v748, %v751
        %v754 = vrot.slane %v728, 3
        %v756 = vmul.f32 %v736, %v754
        %v758 = vrot.slane %v756, 1
        %v760 = vadd.f32 %v753, %v758
        %v761 = vrot.slane %v326, 1
        %v763 = vsub.f32 %v736, %v761
        %v764 = vrot.slane %v728, 4
        %v766 = vmul.f32 %v763, %v764
        %v768 = vrot.slane %v766, 1
        %v770 = vadd.f32 %v760, %v768
        %vm771 = vcmask 261127
        %v772 = vsel %vm771, %v770, 0.0
        %773 = vadd.xlane.f32.xlu0 %v772
        %v774 = vpop.xlane.xlu0 %773
        %v775 = vmul.f32 %v774, 0.125
        %v776 = vstv %s328
        %v777 = vadd.f32 %v775, %v776
        %v778 = vxor.u32 %v777, 2147483648
        %v779 = vmul.f32 %v778, 1.442695
        %v780 = vpow.pop %v779
        %v781 = vadd.f32 %v780, 1.0
        %v782 = vrcp.pop %v781
        %v783 = vmul.f32 1.0, %v782
        %v784 = vstv %s327
        %v785 = vadd.f32 %v727, %v784
        %v786 = vsub.f32 %v785, %v326
        %v787 = vlaneseq
        %v788 = vshrl.u32 %v787, 7
        %v789 = vsub.s32 7, %v788
        %v790 = vrot.slane %v783, %v789
        %v791 = vmul.f32 %v790, %v786
        %v792 = vadd.f32 %v326, %v791
        %v793 = vmax.f32 %v792, 0.0
        %s794 = sld [smem:[#allocation12 + $0x2]]
        %s795 = sld [smem:[#allocation12 + $0x3]]
        %796 = vst.msk [vmem:[#allocation2 + $0x2] sm:$0xff] %vm329, %v793
        %v797 = vld [vmem:[#allocation2] sm:$0xff]
        %v798 = vld [vmem:[#allocation10] sm:$0xff]
        %v799 = vld [vmem:[#allocation10 + $0x8] sm:$0xff]
        %v800 = vld [vmem:[#allocation10 + $0x10] sm:$0xff]
        %v801 = vld [vmem:[#allocation10 + $0x18] sm:$0xff]
        %v802 = vld [vmem:[#allocation2 + $0x1] sm:$0xff]
        %s803 = scalar_lea.vmem [#allocation10], 32
        %v804 = vld [vmem:[%s803] sm:$0xff]
        %v805 = vld [vmem:[%s803 + $0x8] sm:$0xff]
        %v806 = vld [vmem:[%s803 + $0x10] sm:$0xff]
        %v807 = vld [vmem:[%s803 + $0x18] sm:$0xff]
        %v809 = vsel %vm329, %v802, 0
        %811 = vmatprep.subr.mxu0 0.0
        %812 = vmatpush1.msra.mxu0 %v804
        %813 = vmatprep.subr.mxu0 0.0
        %814 = vmatpush1.msra.mxu0 %v805
        %815 = vmatprep.subr.mxu0 0.0
        %816 = vmatpush1.msra.mxu0 %v806
        %817 = vmatprep.subr.mxu0 0.0
        %818 = vmatpush1.msra.mxu0 %v807
        %819 = vmatprep.subr.mxu0 0.0
        %820 = vmatpush1.msra.mxu0 0.0
        %821 = vmatprep.subr.mxu0 0.0
        %822 = vmatpush1.msra.mxu0 0.0
        %823 = vmatprep.subr.mxu0 0.0
        %824 = vmatpush1.msra.mxu0 0.0
        %825 = vmatprep.subr.mxu0 0.0
        %826 = vmatpush1.msra.mxu0 0.0
        %827 = vmatprep.subr.mxu0 0.0
        %828 = vmatpush1.msra.mxu0 0.0
        %829 = vmatprep.subr.mxu0 0.0
        %830 = vmatpush1.msra.mxu0 0.0
        %831 = vmatprep.subr.mxu0 0.0
        %832 = vmatpush1.msra.mxu0 0.0
        %833 = vmatprep.subr.mxu0 0.0
        %834 = vmatpush1.msra.mxu0 0.0
        %835 = vmatprep.subr.mxu0 0.0
        %836 = vmatpush1.msra.mxu0 0.0
        %837 = vmatprep.subr.mxu0 0.0
        %838 = vmatpush1.msra.mxu0 0.0
        %839 = vmatprep.subr.mxu0 0.0
        %840 = vmatpush1.msra.mxu0 0.0
        %841 = vmatprep.subr.mxu0 0.0
        %842 = vmatpush1.msra.mxu0 0.0
        %843 = vmatprep.subr.mxu0 0.0
        %844 = vmatpush1.msra.mxu0 0.0
        %845 = vmatprep.subr.mxu0 0.0
        %846 = vmatpush1.msra.mxu0 0.0
        %847 = vmatprep.subr.mxu0 0.0
        %848 = vmatpush1.msra.mxu0 0.0
        %849 = vmatprep.subr.mxu0 0.0
        %850 = vmatpush1.msra.mxu0 0.0
        %851 = vmatprep.subr.mxu0 0.0
        %852 = vmatpush1.msra.mxu0 0.0
        %853 = vmatprep.subr.mxu0 0.0
        %854 = vmatpush1.msra.mxu0 0.0
        %855 = vmatprep.subr.mxu0 0.0
        %856 = vmatpush1.msra.mxu0 0.0
        %857 = vmatprep.subr.mxu0 0.0
        %858 = vmatpush1.msra.mxu0 0.0
        %859 = vmatprep.subr.mxu0 0.0
        %860 = vmatpush1.msra.mxu0 0.0
        %861 = vmatprep.subr.mxu0 0.0
        %862 = vmatpush1.msra.mxu0 0.0
        %863 = vmatprep.subr.mxu0 0.0
        %864 = vmatpush1.msra.mxu0 0.0
        %865 = vmatprep.subr.mxu0 0.0
        %866 = vmatpush1.msra.mxu0 0.0
        %867 = vmatprep.subr.mxu0 0.0
        %868 = vmatpush1.msra.mxu0 0.0
        %869 = vmatprep.subr.mxu0 0.0
        %870 = vmatpush1.msra.mxu0 0.0
        %871 = vmatprep.subr.mxu0 0.0
        %872 = vmatpush1.msra.mxu0 0.0
        %873 = vmatprep.subr.mxu0 0.0
        %874 = vmatpush1.msra.mxu0 0.0
        %875 = vmatprep.mubr.f32.mxu0 0.0
        %876 = vmatmul.mubr.f32.gmra.mrb[0].mxu0 %v809
        %v877 = vpop.f32.mrb[0].mxu0
        %v878 = vadd.f32 0.0, %v877
        %v879 = vpop.f32.mrb[0].mxu0
        %880 = vdwg.mxu0
        %v882 = vsel %vm329, %v797, 0
        %884 = vmatprep.subr.mxu0 0.0
        %885 = vmatpush1.msra.mxu0 %v798
        %886 = vmatprep.subr.mxu0 0.0
        %887 = vmatpush1.msra.mxu0 %v799
        %888 = vmatprep.subr.mxu0 0.0
        %889 = vmatpush1.msra.mxu0 %v800
        %890 = vmatprep.subr.mxu0 0.0
        %891 = vmatpush1.msra.mxu0 %v801
        %892 = vmatprep.subr.mxu0 0.0
        %893 = vmatpush1.msra.mxu0 0.0
        %894 = vmatprep.subr.mxu0 0.0
        %895 = vmatpush1.msra.mxu0 0.0
        %896 = vmatprep.subr.mxu0 0.0
        %897 = vmatpush1.msra.mxu0 0.0
        %898 = vmatprep.subr.mxu0 0.0
        %899 = vmatpush1.msra.mxu0 0.0
        %900 = vmatprep.subr.mxu0 0.0
        %901 = vmatpush1.msra.mxu0 0.0
        %902 = vmatprep.subr.mxu0 0.0
        %903 = vmatpush1.msra.mxu0 0.0
        %904 = vmatprep.subr.mxu0 0.0
        %905 = vmatpush1.msra.mxu0 0.0
        %906 = vmatprep.subr.mxu0 0.0
        %907 = vmatpush1.msra.mxu0 0.0
        %908 = vmatprep.subr.mxu0 0.0
        %909 = vmatpush1.msra.mxu0 0.0
        %910 = vmatprep.subr.mxu0 0.0
        %911 = vmatpush1.msra.mxu0 0.0
        %912 = vmatprep.subr.mxu0 0.0
        %913 = vmatpush1.msra.mxu0 0.0
        %914 = vmatprep.subr.mxu0 0.0
        %915 = vmatpush1.msra.mxu0 0.0
        %916 = vmatprep.subr.mxu0 0.0
        %917 = vmatpush1.msra.mxu0 0.0
        %918 = vmatprep.subr.mxu0 0.0
        %919 = vmatpush1.msra.mxu0 0.0
        %920 = vmatprep.subr.mxu0 0.0
        %921 = vmatpush1.msra.mxu0 0.0
        %922 = vmatprep.subr.mxu0 0.0
        %923 = vmatpush1.msra.mxu0 0.0
        %924 = vmatprep.subr.mxu0 0.0
        %925 = vmatpush1.msra.mxu0 0.0
        %926 = vmatprep.subr.mxu0 0.0
        %927 = vmatpush1.msra.mxu0 0.0
        %928 = vmatprep.subr.mxu0 0.0
        %929 = vmatpush1.msra.mxu0 0.0
        %930 = vmatprep.subr.mxu0 0.0
        %931 = vmatpush1.msra.mxu0 0.0
        %932 = vmatprep.subr.mxu0 0.0
        %933 = vmatpush1.msra.mxu0 0.0
        %934 = vmatprep.subr.mxu0 0.0
        %935 = vmatpush1.msra.mxu0 0.0
        %936 = vmatprep.subr.mxu0 0.0
        %937 = vmatpush1.msra.mxu0 0.0
        %938 = vmatprep.subr.mxu0 0.0
        %939 = vmatpush1.msra.mxu0 0.0
        %940 = vmatprep.subr.mxu0 0.0
        %941 = vmatpush1.msra.mxu0 0.0
        %942 = vmatprep.subr.mxu0 0.0
        %943 = vmatpush1.msra.mxu0 0.0
        %944 = vmatprep.subr.mxu0 0.0
        %945 = vmatpush1.msra.mxu0 0.0
        %946 = vmatprep.subr.mxu0 0.0
        %947 = vmatpush1.msra.mxu0 0.0
        %948 = vmatprep.mubr.f32.mxu0 0.0
        %949 = vmatmul.mubr.f32.gmra.mrb[0].mxu0 %v882
        %v950 = vpop.f32.mrb[0].mxu0
        %v951 = vadd.f32 %v878, %v950
        %v952 = vpop.f32.mrb[0].mxu0
        %953 = vdwg.mxu0
        %v954 = vld [vmem:[#allocation2 + $0x2] sm:$0xff]
        %s955 = scalar_lea.vmem [#allocation10], 64
        %v956 = vld [vmem:[%s955] sm:$0xff]
        %v957 = vld [vmem:[%s955 + $0x8] sm:$0xff]
        %v958 = vld [vmem:[%s955 + $0x10] sm:$0xff]
        %v959 = vld [vmem:[%s955 + $0x18] sm:$0xff]
        %v961 = vsel %vm329, %v954, 0
        %963 = vmatprep.subr.mxu0 0.0
        %964 = vmatpush1.msra.mxu0 %v956
        %965 = vmatprep.subr.mxu0 0.0
        %966 = vmatpush1.msra.mxu0 %v957
        %967 = vmatprep.subr.mxu0 0.0
        %968 = vmatpush1.msra.mxu0 %v958
        %969 = vmatprep.subr.mxu0 0.0
        %970 = vmatpush1.msra.mxu0 %v959
        %971 = vmatprep.subr.mxu0 0.0
        %972 = vmatpush1.msra.mxu0 0.0
        %973 = vmatprep.subr.mxu0 0.0
        %974 = vmatpush1.msra.mxu0 0.0
        %975 = vmatprep.subr.mxu0 0.0
        %976 = vmatpush1.msra.mxu0 0.0
        %977 = vmatprep.subr.mxu0 0.0
        %978 = vmatpush1.msra.mxu0 0.0
        %979 = vmatprep.subr.mxu0 0.0
        %980 = vmatpush1.msra.mxu0 0.0
        %981 = vmatprep.subr.mxu0 0.0
        %982 = vmatpush1.msra.mxu0 0.0
        %983 = vmatprep.subr.mxu0 0.0
        %984 = vmatpush1.msra.mxu0 0.0
        %985 = vmatprep.subr.mxu0 0.0
        %986 = vmatpush1.msra.mxu0 0.0
        %987 = vmatprep.subr.mxu0 0.0
        %988 = vmatpush1.msra.mxu0 0.0
        %989 = vmatprep.subr.mxu0 0.0
        %990 = vmatpush1.msra.mxu0 0.0
        %991 = vmatprep.subr.mxu0 0.0
        %992 = vmatpush1.msra.mxu0 0.0
        %993 = vmatprep.subr.mxu0 0.0
        %994 = vmatpush1.msra.mxu0 0.0
        %995 = vmatprep.subr.mxu0 0.0
        %996 = vmatpush1.msra.mxu0 0.0
        %997 = vmatprep.subr.mxu0 0.0
        %998 = vmatpush1.msra.mxu0 0.0
        %999 = vmatprep.subr.mxu0 0.0
        %1000 = vmatpush1.msra.mxu0 0.0
        %1001 = vmatprep.subr.mxu0 0.0
        %1002 = vmatpush1.msra.mxu0 0.0
        %1003 = vmatprep.subr.mxu0 0.0
        %1004 = vmatpush1.msra.mxu0 0.0
        %1005 = vmatprep.subr.mxu0 0.0
        %1006 = vmatpush1.msra.mxu0 0.0
        %1007 = vmatprep.subr.mxu0 0.0
        %1008 = vmatpush1.msra.mxu0 0.0
        %1009 = vmatprep.subr.mxu0 0.0
        %1010 = vmatpush1.msra.mxu0 0.0
        %1011 = vmatprep.subr.mxu0 0.0
        %1012 = vmatpush1.msra.mxu0 0.0
        %1013 = vmatprep.subr.mxu0 0.0
        %1014 = vmatpush1.msra.mxu0 0.0
        %1015 = vmatprep.subr.mxu0 0.0
        %1016 = vmatpush1.msra.mxu0 0.0
        %1017 = vmatprep.subr.mxu0 0.0
        %1018 = vmatpush1.msra.mxu0 0.0
        %1019 = vmatprep.subr.mxu0 0.0
        %1020 = vmatpush1.msra.mxu0 0.0
        %1021 = vmatprep.subr.mxu0 0.0
        %1022 = vmatpush1.msra.mxu0 0.0
        %1023 = vmatprep.subr.mxu0 0.0
        %1024 = vmatpush1.msra.mxu0 0.0
        %1025 = vmatprep.subr.mxu0 0.0
        %1026 = vmatpush1.msra.mxu0 0.0
        %1027 = vmatprep.mubr.f32.mxu0 0.0
        %1028 = vmatmul.mubr.f32.gmra.mrb[0].mxu0 %v961
        %v1029 = vpop.f32.mrb[0].mxu0
        %v1030 = vadd.f32 0.0, %v1029
        %v1031 = vpop.f32.mrb[0].mxu0
        %1032 = vdwg.mxu0
        %v1033 = vadd.f32 %v951, %v1030
        %v1034 = vld [vmem:[#allocation2 + $0x3] sm:$0xff]
        %s1035 = scalar_lea.vmem [#allocation10], 96
        %v1036 = vld [vmem:[%s1035] sm:$0xff]
        %v1037 = vld [vmem:[%s1035 + $0x8] sm:$0xff]
        %v1038 = vld [vmem:[%s1035 + $0x10] sm:$0xff]
        %v1039 = vld [vmem:[%s1035 + $0x18] sm:$0xff]
        %v1041 = vsel %vm329, %v1034, 0
        %1043 = vmatprep.subr.mxu0 0.0
        %1044 = vmatpush1.msra.mxu0 %v1036
        %1045 = vmatprep.subr.mxu0 0.0
        %1046 = vmatpush1.msra.mxu0 %v1037
        %1047 = vmatprep.subr.mxu0 0.0
        %1048 = vmatpush1.msra.mxu0 %v1038
        %1049 = vmatprep.subr.mxu0 0.0
        %1050 = vmatpush1.msra.mxu0 %v1039
        %1051 = vmatprep.subr.mxu0 0.0
        %1052 = vmatpush1.msra.mxu0 0.0
        %1053 = vmatprep.subr.mxu0 0.0
        %1054 = vmatpush1.msra.mxu0 0.0
        %1055 = vmatprep.subr.mxu0 0.0
        %1056 = vmatpush1.msra.mxu0 0.0
        %1057 = vmatprep.subr.mxu0 0.0
        %1058 = vmatpush1.msra.mxu0 0.0
        %1059 = vmatprep.subr.mxu0 0.0
        %1060 = vmatpush1.msra.mxu0 0.0
        %1061 = vmatprep.subr.mxu0 0.0
        %1062 = vmatpush1.msra.mxu0 0.0
        %1063 = vmatprep.subr.mxu0 0.0
        %1064 = vmatpush1.msra.mxu0 0.0
        %1065 = vmatprep.subr.mxu0 0.0
        %1066 = vmatpush1.msra.mxu0 0.0
        %1067 = vmatprep.subr.mxu0 0.0
        %1068 = vmatpush1.msra.mxu0 0.0
        %1069 = vmatprep.subr.mxu0 0.0
        %1070 = vmatpush1.msra.mxu0 0.0
        %1071 = vmatprep.subr.mxu0 0.0
        %1072 = vmatpush1.msra.mxu0 0.0
        %1073 = vmatprep.subr.mxu0 0.0
        %1074 = vmatpush1.msra.mxu0 0.0
        %1075 = vmatprep.subr.mxu0 0.0
        %1076 = vmatpush1.msra.mxu0 0.0
        %1077 = vmatprep.subr.mxu0 0.0
        %1078 = vmatpush1.msra.mxu0 0.0
        %1079 = vmatprep.subr.mxu0 0.0
        %1080 = vmatpush1.msra.mxu0 0.0
        %1081 = vmatprep.subr.mxu0 0.0
        %1082 = vmatpush1.msra.mxu0 0.0
        %1083 = vmatprep.subr.mxu0 0.0
        %1084 = vmatpush1.msra.mxu0 0.0
        %1085 = vmatprep.subr.mxu0 0.0
        %1086 = vmatpush1.msra.mxu0 0.0
        %1087 = vmatprep.subr.mxu0 0.0
        %1088 = vmatpush1.msra.mxu0 0.0
        %1089 = vmatprep.subr.mxu0 0.0
        %1090 = vmatpush1.msra.mxu0 0.0
        %1091 = vmatprep.subr.mxu0 0.0
        %1092 = vmatpush1.msra.mxu0 0.0
        %1093 = vmatprep.subr.mxu0 0.0
        %1094 = vmatpush1.msra.mxu0 0.0
        %1095 = vmatprep.subr.mxu0 0.0
        %1096 = vmatpush1.msra.mxu0 0.0
        %1097 = vmatprep.subr.mxu0 0.0
        %1098 = vmatpush1.msra.mxu0 0.0
        %1099 = vmatprep.subr.mxu0 0.0
        %1100 = vmatpush1.msra.mxu0 0.0
        %1101 = vmatprep.subr.mxu0 0.0
        %1102 = vmatpush1.msra.mxu0 0.0
        %1103 = vmatprep.subr.mxu0 0.0
        %1104 = vmatpush1.msra.mxu0 0.0
        %1105 = vmatprep.subr.mxu0 0.0
        %1106 = vmatpush1.msra.mxu0 0.0
        %1107 = vmatprep.mubr.f32.mxu0 0.0
        %1108 = vmatmul.mubr.f32.gmra.mrb[0].mxu0 %v1041
        %v1109 = vpop.f32.mrb[0].mxu0
        %v1110 = vadd.f32 0.0, %v1109
        %v1111 = vpop.f32.mrb[0].mxu0
        %1112 = vdwg.mxu0
        %v1113 = vadd.f32 %v1033, %v1110
        %v1114 = vld [vmem:[#allocation2 + $0x4] sm:$0xff]
        %s1115 = scalar_lea.vmem [#allocation10], 128
        %v1116 = vld [vmem:[%s1115] sm:$0xff]
        %v1117 = vld [vmem:[%s1115 + $0x8] sm:$0xff]
        %v1118 = vld [vmem:[%s1115 + $0x10] sm:$0xff]
        %v1119 = vld [vmem:[%s1115 + $0x18] sm:$0xff]
        %v1121 = vsel %vm329, %v1114, 0
        %1123 = vmatprep.subr.mxu0 0.0
        %1124 = vmatpush1.msra.mxu0 %v1116
        %1125 = vmatprep.subr.mxu0 0.0
        %1126 = vmatpush1.msra.mxu0 %v1117
        %1127 = vmatprep.subr.mxu0 0.0
        %1128 = vmatpush1.msra.mxu0 %v1118
        %1129 = vmatprep.subr.mxu0 0.0
        %1130 = vmatpush1.msra.mxu0 %v1119
        %1131 = vmatprep.subr.mxu0 0.0
        %1132 = vmatpush1.msra.mxu0 0.0
        %1133 = vmatprep.subr.mxu0 0.0
        %1134 = vmatpush1.msra.mxu0 0.0
        %1135 = vmatprep.subr.mxu0 0.0
        %1136 = vmatpush1.msra.mxu0 0.0
        %1137 = vmatprep.subr.mxu0 0.0
        %1138 = vmatpush1.msra.mxu0 0.0
        %1139 = vmatprep.subr.mxu0 0.0
        %1140 = vmatpush1.msra.mxu0 0.0
        %1141 = vmatprep.subr.mxu0 0.0
        %1142 = vmatpush1.msra.mxu0 0.0
        %1143 = vmatprep.subr.mxu0 0.0
        %1144 = vmatpush1.msra.mxu0 0.0
        %1145 = vmatprep.subr.mxu0 0.0
        %1146 = vmatpush1.msra.mxu0 0.0
        %1147 = vmatprep.subr.mxu0 0.0
        %1148 = vmatpush1.msra.mxu0 0.0
        %1149 = vmatprep.subr.mxu0 0.0
        %1150 = vmatpush1.msra.mxu0 0.0
        %1151 = vmatprep.subr.mxu0 0.0
        %1152 = vmatpush1.msra.mxu0 0.0
        %1153 = vmatprep.subr.mxu0 0.0
        %1154 = vmatpush1.msra.mxu0 0.0
        %1155 = vmatprep.subr.mxu0 0.0
        %1156 = vmatpush1.msra.mxu0 0.0
        %1157 = vmatprep.subr.mxu0 0.0
        %1158 = vmatpush1.msra.mxu0 0.0
        %1159 = vmatprep.subr.mxu0 0.0
        %1160 = vmatpush1.msra.mxu0 0.0
        %1161 = vmatprep.subr.mxu0 0.0
        %1162 = vmatpush1.msra.mxu0 0.0
        %1163 = vmatprep.subr.mxu0 0.0
        %1164 = vmatpush1.msra.mxu0 0.0
        %1165 = vmatprep.subr.mxu0 0.0
        %1166 = vmatpush1.msra.mxu0 0.0
        %1167 = vmatprep.subr.mxu0 0.0
        %1168 = vmatpush1.msra.mxu0 0.0
        %1169 = vmatprep.subr.mxu0 0.0
        %1170 = vmatpush1.msra.mxu0 0.0
        %1171 = vmatprep.subr.mxu0 0.0
        %1172 = vmatpush1.msra.mxu0 0.0
        %1173 = vmatprep.subr.mxu0 0.0
        %1174 = vmatpush1.msra.mxu0 0.0
        %1175 = vmatprep.subr.mxu0 0.0
        %1176 = vmatpush1.msra.mxu0 0.0
        %1177 = vmatprep.subr.mxu0 0.0
        %1178 = vmatpush1.msra.mxu0 0.0
        %1179 = vmatprep.subr.mxu0 0.0
        %1180 = vmatpush1.msra.mxu0 0.0
        %1181 = vmatprep.subr.mxu0 0.0
        %1182 = vmatpush1.msra.mxu0 0.0
        %1183 = vmatprep.subr.mxu0 0.0
        %1184 = vmatpush1.msra.mxu0 0.0
        %1185 = vmatprep.subr.mxu0 0.0
        %1186 = vmatpush1.msra.mxu0 0.0
        %1187 = vmatprep.mubr.f32.mxu0 0.0
        %1188 = vmatmul.mubr.f32.gmra.mrb[0].mxu0 %v1121
        %v1189 = vpop.f32.mrb[0].mxu0
        %v1190 = vadd.f32 0.0, %v1189
        %v1191 = vpop.f32.mrb[0].mxu0
        %1192 = vdwg.mxu0
        %v1193 = vadd.f32 %v1113, %v1190
        %v1194 = vld [vmem:[%s4] sm:$0x1f]
        %v1195 = vsel %vm329, %v793, 0.0
        %v1196 = vrot.slane %v1195, 4
        %v1197 = vadd.f32 %v1195, %v1196
        %v1198 = vrot.slane %v1197, 2
        %v1199 = vadd.f32 %v1197, %v1198
        %v1200 = vrot.slane %v1199, 1
        %v1201 = vadd.f32 %v1199, %v1200
        %v1202 = vsub.f32 %v1201, %v793
        %v1204 = vrot.slane %v793, 7
        %v1206 = vsub.f32 %v1202, %v1204
        %v1208 = vrot.slane %v1194, 1
        %v1210 = vmul.f32 %v1206, %v1208
        %v1211 = vrot.slane %v1194, 2
        %v1213 = vmul.f32 %v1202, %v1211
        %v1214 = vadd.f32 %v1210, %v1213
        %v1215 = vmul.f32 %v1201, %v1194
        %v1217 = vrot.slane %v1215, 3
        %v1219 = vadd.f32 %v1214, %v1217
        %v1220 = vrot.slane %v1194, 3
        %v1222 = vmul.f32 %v1202, %v1220
        %v1224 = vrot.slane %v1222, 1
        %v1226 = vadd.f32 %v1219, %v1224
        %v1227 = vrot.slane %v793, 1
        %v1229 = vsub.f32 %v1202, %v1227
        %v1230 = vrot.slane %v1194, 4
        %v1232 = vmul.f32 %v1229, %v1230
        %v1234 = vrot.slane %v1232, 1
        %v1236 = vadd.f32 %v1226, %v1234
        %v1237 = vsel %vm771, %v1236, 0.0
        %1238 = vadd.xlane.f32.xlu0 %v1237
        %v1239 = vpop.xlane.xlu0 %1238
        %v1240 = vmul.f32 %v1239, 0.125
        %v1241 = vstv %s795
        %v1242 = vadd.f32 %v1240, %v1241
        %v1243 = vxor.u32 %v1242, 2147483648
        %v1244 = vmul.f32 %v1243, 1.442695
        %v1245 = vpow.pop %v1244
        %v1246 = vadd.f32 %v1245, 1.0
        %v1247 = vrcp.pop %v1246
        %v1248 = vmul.f32 1.0, %v1247
        %v1249 = vstv %s794
        %v1250 = vadd.f32 %v1193, %v1249
        %v1251 = vsub.f32 %v1250, %v793
        %v1252 = vlaneseq
        %v1253 = vshrl.u32 %v1252, 7
        %v1254 = vsub.s32 7, %v1253
        %v1255 = vrot.slane %v1248, %v1254
        %v1256 = vmul.f32 %v1255, %v1251
        %v1257 = vadd.f32 %v793, %v1256
        %v1258 = vmax.f32 %v1257, 0.0
        %1259 = vst.msk [vmem:[%s322] sm:$0xff] %vm329, %v1258
        %s1260 = sand.u32 %s165, 1
        %s1261 = scalar_lea.sflag [#allocation5], %s1260
        %s1262 = sand.u32 %s165, 1
        %s1263 = smul.addr %s1262, 8
        %s1264 = scalar_lea.vmem [#allocation13], %s1263
        // Predicated region
        $region65: #{tpu_custom_call.1} parent=43 // pred_check
          %p1265 = pneg %p175
        $region66: #{tpu_custom_call.1} parent=43 // pred_check_branch
          %1267 = sbr.rel (%p1265) target = $region68
        $region67: #{tpu_custom_call.1} parent=43 // pred_region
          %s1269 = ssub.s32 128, 128
          %1270 = vsyncadd %s1261, %s1269
          %s1271 = smul.addr %s26, 128
          %s1272 = scalar_lea.hbm %s6, %s1271
          %s1274 = sshll.u32 %s1264, 4
          %s1275 = int_to_ptr.vmem [resolvable:$true] %s1274
          %1277 = dma.vmem_to_hbm [thread:$0]  %s1275, 128, %s1272, %s1261
        $region68: #{tpu_custom_call.1} parent=43 // pred_fallthru
          _
      $region44: #{tpu_custom_call.1} parent=5 // pred_fallthru
        _
      %p1278 = scmp.le.s32.totalorder 2, %s21
      // Predicated region
      $region69: #{tpu_custom_call.1} parent=5 // pred_check
        %p1279 = pneg %p1278
      $region70: #{tpu_custom_call.1} parent=5 // pred_check_branch
        %1281 = sbr.rel (%p1279) target = $region72
      $region71: #{tpu_custom_call.1} parent=5 // pred_region
        %s1282 = ssub.s32 %s21, 2
        // Predicated region
        $region73: #{tpu_custom_call.1} parent=71 // pred_check
          %p1283 = pneg %p181
        $region74: #{tpu_custom_call.1} parent=71 // pred_check_branch
          %1285 = sbr.rel (%p1283) target = $region76
        $region75: #{tpu_custom_call.1} parent=71 // pred_region
          %s1286 = sand.u32 %s166, 1
          %s1287 = scalar_lea.sflag [#allocation5], %s1286
          %s1288 = sand.u32 %s166, 1
          %s1289 = smul.addr %s1288, 8
          %s1290 = scalar_lea.vmem [#allocation13], %s1289
          %1291 = dma.done %s1287, 128
        $region76: #{tpu_custom_call.1} parent=71 // pred_fallthru
          _
      $region72: #{tpu_custom_call.1} parent=5 // pred_fallthru
        _
    $region6: #{tpu_custom_call.1} parent=1 // loop_footer
      %s25 = sadd.s32 1, %s21
    $region7: #{tpu_custom_call.1} parent=1 // loop_footer_branch
      %20 = sbr.rel target = $region3
    $region8: #{tpu_custom_call.1} parent=1 // loop_exit
      _
    %1292 = vsyncpa [#allocation4], 1
    %s1293 = scalar_lea.sflag [#allocation4], 1
    %1294 = vsyncpa %s1293, 1
    %1295 = vsyncpa [#allocation8], 1
    %1296 = vsyncpa [#allocation11], 1
    %1297 = vsyncpa [#allocation5], 1
    %s1298 = scalar_lea.sflag [#allocation5], 1
    %1299 = vsyncpa %s1298, 1
    %1300 = vsyncpa [#allocation6], 1
    %s1301 = scalar_lea.sflag [#allocation6], 1
    %1302 = vsyncpa %s1301, 1

</llo_original>
